<compile_context>
chip_gen: v7x
topology: tpu7x:2x2x1
jax: 0.10.0
libtpu: 0.0.40
codegen_flags: <defaults>
</compile_context>

<pallas_src>
import functools
import math

import jax
import jax.numpy as jnp
from jax.experimental import pallas as pl
from jax.experimental.pallas import tpu as pltpu

_LN_EPS = 1e-6   # nn.LayerNorm(eps=1e-06) in EncoderLayer
_BN_EPS = 1e-5   # nn.BatchNorm1d default


# ---------------------------------------------------------------- kernel ----

def _transformer_kernel(x_ref, w_in_ref, wqkv_ref, wh_ref, vec_ref,
                        w1_ref, b1_ref, w2_ref, w_out_ref, bn_ref,
                        o_ref, *, num_heads, num_layers, mm_dtype):
    """Whole forward pass (input projection + all encoder layers + classifier
    head) in one invocation; the layer loop is a static unrolled Python loop
    and the activation `h` stays in registers/VMEM."""

    def mm(a, b):  # MXU matmul, optional low-precision inputs, f32 accumulate
        return jnp.dot(a.astype(mm_dtype), b.astype(mm_dtype),
                       preferred_element_type=jnp.float32)

    n = x_ref.shape[0]
    d_model = wh_ref.shape[-1]
    d_k = d_model // num_heads

    # ---- encoder front: Linear(d_in, d_model, bias=False) -> ReLU -----------
    h = jnp.maximum(mm(x_ref[...], w_in_ref[...]), 0.0)          # (N, d_model)

    for l in range(num_layers):
        vecs = vec_ref[l]                       # (8, d_model) packed vectors
        b_h   = vecs[0:1, :]
        ln1_g = vecs[1:2, :]
        ln1_b = vecs[2:3, :]
        b_f2  = vecs[3:4, :]
        ln2_g = vecs[4:5, :]
        ln2_b = vecs[5:6, :]

        # ---- multi-head self-attention -----------------------------------
        # One fused lane-dense projection; 1/sqrt(d_k) folded into Q columns.
        qkv = mm(h, wqkv_ref[l])                # (N, 3*d_model)

        def heads_of(off):                      # (H, N, d_k), leading head axis
            return jnp.stack(
                [qkv[:, off + hh * d_k: off + (hh + 1) * d_k]
                 for hh in range(num_heads)], axis=0)

        q = heads_of(0)
        k = heads_of(d_model)
        v = heads_of(2 * d_model)

        s = jnp.einsum('hqd,hkd->hqk', q.astype(mm_dtype), k.astype(mm_dtype),
                       preferred_element_type=jnp.float32)       # (H, N, N)
        s = s - jnp.max(s, axis=-1, keepdims=True)               # softmax(-1)
        p = jnp.exp(s)
        p = p * pl.reciprocal(jnp.sum(p, axis=-1, keepdims=True), approx=True)
        ctx = jnp.einsum('hqk,hkd->hqd', p.astype(mm_dtype), v.astype(mm_dtype),
                         preferred_element_type=jnp.float32)     # (H, N, d_k)

        # group_heads (lane concat) + W_h: one (N,d_model)@(d_model,d_model).
        grouped = jnp.concatenate([ctx[hh] for hh in range(num_heads)], axis=-1)
        attn = mm(grouped, wh_ref[l]) + b_h                      # (N, d_model)

        # ---- residual + LayerNorm1 (eps=1e-6, biased variance) -------------
        y1 = h + attn
        mu1 = jnp.mean(y1, axis=-1, keepdims=True)
        var1 = jnp.mean(jnp.square(y1 - mu1), axis=-1, keepdims=True)
        out1 = (y1 - mu1) * jax.lax.rsqrt(var1 + _LN_EPS) * ln1_g + ln1_b

        # ---- FFN (ker=0 path): Linear -> ReLU -> Linear ---------------------
        mid = jnp.maximum(mm(out1, w1_ref[l]) + b1_ref[l], 0.0)  # (N, hidden)
        ffn = mm(mid, w2_ref[l]) + b_f2                          # (N, d_model)

        # ---- residual + LayerNorm2 -----------------------------------------
        y2 = out1 + ffn
        mu2 = jnp.mean(y2, axis=-1, keepdims=True)
        var2 = jnp.mean(jnp.square(y2 - mu2), axis=-1, keepdims=True)
        h = (y2 - mu2) * jax.lax.rsqrt(var2 + _LN_EPS) * ln2_g + ln2_b

    # ---- classifier head: Linear(no bias) -> BatchNorm1d -> ReLU ------------
    # Output is lane-padded to 128 (W_out / BN params zero-padded host-side);
    # padded columns come out as exactly 0 and are sliced off in the wrapper.
    z = mm(h, w_out_ref[...])                                    # (N, 128)
    mu = jnp.mean(z, axis=0, keepdims=True)
    var = jnp.mean(jnp.square(z - mu), axis=0, keepdims=True)
    gamma = bn_ref[0:1, :]
    beta = bn_ref[1:2, :]
    o_ref[...] = jnp.maximum(
        (z - mu) * jax.lax.rsqrt(var + _BN_EPS) * gamma + beta, 0.0)


# -------------------------------------------------------------- wrappers ----

def transformer_forward(params, x, *, num_heads, d_out,
                        matmul_dtype=jnp.float32):
    """Single pallas_call, no grid: every weight is a whole-array VMEM ref.
    `matmul_dtype=jnp.bfloat16` enables bf16 MXU inputs (f32 accumulate) on
    v5e/v6e/v7x at a small numerical cost."""
    n = x.shape[0]
    num_layers = params["wqkv"].shape[0]
    d_out_pad = params["w_out"].shape[1]

    kernel = functools.partial(_transformer_kernel, num_heads=num_heads,
                               num_layers=num_layers, mm_dtype=matmul_dtype)
    out_pad = pl.pallas_call(
        kernel,
        out_shape=jax.ShapeDtypeStruct((n, d_out_pad), jnp.float32),
    )(x, params["w_in"], params["wqkv"], params["wh"], params["vecs"],
      params["w1"], params["b1"], params["w2"], params["w_out"], params["bn"])
    return out_pad[:, :d_out]


def init_params(key, num_layers, d_in, d_model, num_heads, hidden_dim, d_out,
                d_out_pad=128):
    """Deterministic synthetic parameters stored as (fan_in, fan_out).
    Per-layer weights stacked with a leading layer axis; QKV fused into one
    (d_model, 3*d_model) matrix with the attention scale folded into the Q
    columns; the small per-layer vectors packed into one (L, 8, d_model) slab;
    classifier weights zero-padded to 128 output lanes."""
    d_k = d_model // num_heads
    scale = 1.0 / math.sqrt(d_k)
    k = key

    def nxt():
        nonlocal k
        k, sub = jax.random.split(k)
        return sub

    def lin_w(fan_in, fan_out):
        bound = 1.0 / math.sqrt(fan_in)
        return jax.random.uniform(nxt(), (fan_in, fan_out), jnp.float32,
                                  -bound, bound)

    def lin_b(fan_in, fan_out):
        bound = 1.0 / math.sqrt(fan_in)
        return jax.random.uniform(nxt(), (fan_out,), jnp.float32, -bound, bound)

    w_in = lin_w(d_in, d_model)

    wqkv_l, wh_l, vec_l, w1_l, b1_l, w2_l = [], [], [], [], [], []
    ones_d = jnp.ones((d_model,), jnp.float32)
    zeros_d = jnp.zeros((d_model,), jnp.float32)
    for _ in range(num_layers):
        wq = lin_w(d_model, d_model) * scale          # fold 1/sqrt(d_k) into W_q
        wk = lin_w(d_model, d_model)
        wv = lin_w(d_model, d_model)
        wqkv_l.append(jnp.concatenate([wq, wk, wv], axis=1))  # (d_model, 3*d_model)
        wh_l.append(lin_w(d_model, d_model))
        b_h = lin_b(d_model, d_model)
        b_f2 = lin_b(hidden_dim, d_model)
        packed = jnp.stack([b_h, ones_d, zeros_d, b_f2, ones_d, zeros_d], axis=0)
        vec_l.append(jnp.concatenate(
            [packed, jnp.zeros((2, d_model), jnp.float32)], axis=0))  # (8, d_model)
        w1_l.append(lin_w(d_model, hidden_dim))
        b1_l.append(lin_b(d_model, hidden_dim)[None, :])              # (1, hidden)
        w2_l.append(lin_w(hidden_dim, d_model))

    w_out = lin_w(d_model, d_out)
    w_out_p = jnp.zeros((d_model, d_out_pad), jnp.float32).at[:, :d_out].set(w_out)
    bn = jnp.zeros((2, d_out_pad), jnp.float32).at[0, :d_out].set(1.0)  # gamma, beta

    stack = lambda xs: jnp.stack(xs, axis=0)
    return {
        "w_in": w_in,
        "wqkv": stack(wqkv_l),
        "wh": stack(wh_l),
        "vecs": stack(vec_l),
        "w1": stack(w1_l),
        "b1": stack(b1_l),
        "w2": stack(w2_l),
        "w_out": w_out_p,
        "bn": bn,
    }


# ------------------------------------------------------------------ main ----

if __name__ == "__main__":
    num_layers, d_in, d_model, num_heads, hidden_dim, d_out = 2, 4, 32, 4, 64, 8
    N = 8

    key = jax.random.PRNGKey(0)
    kx, kp = jax.random.split(key)
    x = jax.random.normal(kx, (N, d_in), dtype=jnp.float32)
    params = init_params(kp, num_layers, d_in, d_model, num_heads,
                         hidden_dim, d_out)

    out = transformer_forward(params, x, num_heads=num_heads, d_out=d_out)
    out = jax.block_until_ready(out)
    assert out.shape == (N, d_out) and out.dtype == jnp.float32
    assert bool(jnp.all(jnp.isfinite(out)))
    print("KERNEL_OK")
</pallas_src>

<mosaic_0001>
module attributes {stable_mosaic.version = 11 : i64} {
  func.func @_transformer_kernel(%arg0: memref<8x4xf32, #tpu.memory_space<vmem>>, %arg1: memref<4x32xf32, #tpu.memory_space<vmem>>, %arg2: memref<2x32x96xf32, #tpu.memory_space<vmem>>, %arg3: memref<2x32x32xf32, #tpu.memory_space<vmem>>, %arg4: memref<2x8x32xf32, #tpu.memory_space<vmem>>, %arg5: memref<2x32x64xf32, #tpu.memory_space<vmem>>, %arg6: memref<2x1x64xf32, #tpu.memory_space<vmem>>, %arg7: memref<2x64x32xf32, #tpu.memory_space<vmem>>, %arg8: memref<32x128xf32, #tpu.memory_space<vmem>>, %arg9: memref<2x128xf32, #tpu.memory_space<vmem>>, %arg10: memref<8x128xf32, #tpu.memory_space<vmem>>) attributes {dimension_semantics = [], scalar_prefetch = 0 : i64, scratch_operands = 0 : i64, tpu.core_type = #tpu.core_type<tc>} {
    %c0 = arith.constant 0 : index
    %c0_0 = arith.constant 0 : index
    %0 = vector.load %arg0[%c0, %c0_0] : memref<8x4xf32, #tpu.memory_space<vmem>>, vector<8x4xf32>
    %c0_1 = arith.constant 0 : index
    %c0_2 = arith.constant 0 : index
    %1 = vector.load %arg1[%c0_1, %c0_2] : memref<4x32xf32, #tpu.memory_space<vmem>>, vector<4x32xf32>
    %cst = arith.constant dense<0.000000e+00> : vector<8x32xf32>
    %2 = tpu.matmul %0, %1, %cst {dimension_numbers = #tpu.dot_dimension_numbers<[1], [0], [0], [1], [0, 0, 1, 1], [], []>} : vector<8x4xf32>, vector<4x32xf32>, vector<8x32xf32> -> vector<8x32xf32>
    %cst_3 = arith.constant 0.000000e+00 : f32
    %3 = vector.broadcast %cst_3 : f32 to vector<8x32xf32>
    %4 = arith.maximumf %2, %3 : vector<8x32xf32>
    %c0_4 = arith.constant 0 : index
    %c0_5 = arith.constant 0 : index
    %c0_6 = arith.constant 0 : index
    %5 = vector.load %arg4[%c0_4, %c0_5, %c0_6] : memref<2x8x32xf32, #tpu.memory_space<vmem>>, vector<1x8x32xf32>
    %6 = vector.shape_cast %5 : vector<1x8x32xf32> to vector<8x32xf32>
    %7 = vector.extract_strided_slice %6 {offsets = [0, 0], sizes = [1, 32], strides = [1, 1]} : vector<8x32xf32> to vector<1x32xf32>
    %8 = vector.extract_strided_slice %6 {offsets = [1, 0], sizes = [1, 32], strides = [1, 1]} : vector<8x32xf32> to vector<1x32xf32>
    %9 = vector.extract_strided_slice %6 {offsets = [2, 0], sizes = [1, 32], strides = [1, 1]} : vector<8x32xf32> to vector<1x32xf32>
    %10 = vector.extract_strided_slice %6 {offsets = [3, 0], sizes = [1, 32], strides = [1, 1]} : vector<8x32xf32> to vector<1x32xf32>
    %11 = vector.extract_strided_slice %6 {offsets = [4, 0], sizes = [1, 32], strides = [1, 1]} : vector<8x32xf32> to vector<1x32xf32>
    %12 = vector.extract_strided_slice %6 {offsets = [5, 0], sizes = [1, 32], strides = [1, 1]} : vector<8x32xf32> to vector<1x32xf32>
    %c0_7 = arith.constant 0 : index
    %c0_8 = arith.constant 0 : index
    %c0_9 = arith.constant 0 : index
    %13 = vector.load %arg2[%c0_7, %c0_8, %c0_9] : memref<2x32x96xf32, #tpu.memory_space<vmem>>, vector<1x32x96xf32>
    %14 = vector.shape_cast %13 : vector<1x32x96xf32> to vector<32x96xf32>
    %cst_10 = arith.constant dense<0.000000e+00> : vector<8x96xf32>
    %15 = tpu.matmul %4, %14, %cst_10 {dimension_numbers = #tpu.dot_dimension_numbers<[1], [0], [0], [1], [0, 0, 1, 1], [], []>} : vector<8x32xf32>, vector<32x96xf32>, vector<8x96xf32> -> vector<8x96xf32>
    %16 = vector.extract_strided_slice %15 {offsets = [0, 0], sizes = [8, 8], strides = [1, 1]} : vector<8x96xf32> to vector<8x8xf32>
    %17 = vector.extract_strided_slice %15 {offsets = [0, 8], sizes = [8, 8], strides = [1, 1]} : vector<8x96xf32> to vector<8x8xf32>
    %18 = vector.extract_strided_slice %15 {offsets = [0, 16], sizes = [8, 8], strides = [1, 1]} : vector<8x96xf32> to vector<8x8xf32>
    %19 = vector.extract_strided_slice %15 {offsets = [0, 24], sizes = [8, 8], strides = [1, 1]} : vector<8x96xf32> to vector<8x8xf32>
    %20 = vector.shape_cast %16 : vector<8x8xf32> to vector<1x8x8xf32>
    %21 = vector.shape_cast %17 : vector<8x8xf32> to vector<1x8x8xf32>
    %22 = vector.shape_cast %18 : vector<8x8xf32> to vector<1x8x8xf32>
    %23 = vector.shape_cast %19 : vector<8x8xf32> to vector<1x8x8xf32>
    %24 = tpu.concatenate %20, %21, %22, %23 in 0 : vector<1x8x8xf32>, vector<1x8x8xf32>, vector<1x8x8xf32>, vector<1x8x8xf32> -> vector<4x8x8xf32>
    %25 = vector.extract_strided_slice %15 {offsets = [0, 32], sizes = [8, 8], strides = [1, 1]} : vector<8x96xf32> to vector<8x8xf32>
    %26 = vector.extract_strided_slice %15 {offsets = [0, 40], sizes = [8, 8], strides = [1, 1]} : vector<8x96xf32> to vector<8x8xf32>
    %27 = vector.extract_strided_slice %15 {offsets = [0, 48], sizes = [8, 8], strides = [1, 1]} : vector<8x96xf32> to vector<8x8xf32>
    %28 = vector.extract_strided_slice %15 {offsets = [0, 56], sizes = [8, 8], strides = [1, 1]} : vector<8x96xf32> to vector<8x8xf32>
    %29 = vector.shape_cast %25 : vector<8x8xf32> to vector<1x8x8xf32>
    %30 = vector.shape_cast %26 : vector<8x8xf32> to vector<1x8x8xf32>
    %31 = vector.shape_cast %27 : vector<8x8xf32> to vector<1x8x8xf32>
    %32 = vector.shape_cast %28 : vector<8x8xf32> to vector<1x8x8xf32>
    %33 = tpu.concatenate %29, %30, %31, %32 in 0 : vector<1x8x8xf32>, vector<1x8x8xf32>, vector<1x8x8xf32>, vector<1x8x8xf32> -> vector<4x8x8xf32>
    %34 = vector.extract_strided_slice %15 {offsets = [0, 64], sizes = [8, 8], strides = [1, 1]} : vector<8x96xf32> to vector<8x8xf32>
    %35 = vector.extract_strided_slice %15 {offsets = [0, 72], sizes = [8, 8], strides = [1, 1]} : vector<8x96xf32> to vector<8x8xf32>
    %36 = vector.extract_strided_slice %15 {offsets = [0, 80], sizes = [8, 8], strides = [1, 1]} : vector<8x96xf32> to vector<8x8xf32>
    %37 = vector.extract_strided_slice %15 {offsets = [0, 88], sizes = [8, 8], strides = [1, 1]} : vector<8x96xf32> to vector<8x8xf32>
    %38 = vector.shape_cast %34 : vector<8x8xf32> to vector<1x8x8xf32>
    %39 = vector.shape_cast %35 : vector<8x8xf32> to vector<1x8x8xf32>
    %40 = vector.shape_cast %36 : vector<8x8xf32> to vector<1x8x8xf32>
    %41 = vector.shape_cast %37 : vector<8x8xf32> to vector<1x8x8xf32>
    %42 = tpu.concatenate %38, %39, %40, %41 in 0 : vector<1x8x8xf32>, vector<1x8x8xf32>, vector<1x8x8xf32>, vector<1x8x8xf32> -> vector<4x8x8xf32>
    "tpu.trace_start"() <{level = 10 : i32, message = "hqd,hkd->hqk"}> : () -> ()
    %cst_11 = arith.constant dense<0.000000e+00> : vector<4x8x8xf32>
    %43 = tpu.matmul %24, %33, %cst_11 {dimension_numbers = #tpu.dot_dimension_numbers<[2], [2], [1], [1], [0, 0, 0, 1, 1, 1], [0], [0]>} : vector<4x8x8xf32>, vector<4x8x8xf32>, vector<4x8x8xf32> -> vector<4x8x8xf32>
    "tpu.trace_stop"() : () -> ()
    %cst_12 = arith.constant dense<0xFF800000> : vector<4x8xf32>
    %44 = vector.multi_reduction <maximumf>, %43, %cst_12 [2] : vector<4x8x8xf32> to vector<4x8xf32>
    %45 = vector.shape_cast %44 : vector<4x8xf32> to vector<4x8x1xf32>
    %46 = vector.broadcast %45 : vector<4x8x1xf32> to vector<4x8x8xf32>
    %47 = arith.subf %43, %46 : vector<4x8x8xf32>
    %48 = math.exp %47 : vector<4x8x8xf32>
    %cst_13 = arith.constant dense<0.000000e+00> : vector<4x8xf32>
    %49 = vector.multi_reduction <add>, %48, %cst_13 [2] : vector<4x8x8xf32> to vector<4x8xf32>
    %50 = vector.shape_cast %49 : vector<4x8xf32> to vector<4x8x1xf32>
    %51 = tpu.reciprocal %50 {approx = true} : vector<4x8x1xf32> -> vector<4x8x1xf32>
    %52 = vector.broadcast %51 : vector<4x8x1xf32> to vector<4x8x8xf32>
    %53 = arith.mulf %48, %52 : vector<4x8x8xf32>
    "tpu.trace_start"() <{level = 10 : i32, message = "hqk,hkd->hqd"}> : () -> ()
    %cst_14 = arith.constant dense<0.000000e+00> : vector<4x8x8xf32>
    %54 = tpu.matmul %53, %42, %cst_14 {dimension_numbers = #tpu.dot_dimension_numbers<[2], [1], [1], [2], [0, 0, 0, 1, 1, 2], [0], [0]>} : vector<4x8x8xf32>, vector<4x8x8xf32>, vector<4x8x8xf32> -> vector<4x8x8xf32>
    "tpu.trace_stop"() : () -> ()
    %55 = vector.extract_strided_slice %54 {offsets = [0, 0, 0], sizes = [1, 8, 8], strides = [1, 1, 1]} : vector<4x8x8xf32> to vector<1x8x8xf32>
    %56 = vector.shape_cast %55 : vector<1x8x8xf32> to vector<8x8xf32>
    %57 = vector.extract_strided_slice %54 {offsets = [1, 0, 0], sizes = [1, 8, 8], strides = [1, 1, 1]} : vector<4x8x8xf32> to vector<1x8x8xf32>
    %58 = vector.shape_cast %57 : vector<1x8x8xf32> to vector<8x8xf32>
    %59 = vector.extract_strided_slice %54 {offsets = [2, 0, 0], sizes = [1, 8, 8], strides = [1, 1, 1]} : vector<4x8x8xf32> to vector<1x8x8xf32>
    %60 = vector.shape_cast %59 : vector<1x8x8xf32> to vector<8x8xf32>
    %61 = vector.extract_strided_slice %54 {offsets = [3, 0, 0], sizes = [1, 8, 8], strides = [1, 1, 1]} : vector<4x8x8xf32> to vector<1x8x8xf32>
    %62 = vector.shape_cast %61 : vector<1x8x8xf32> to vector<8x8xf32>
    %63 = tpu.concatenate %56, %58, %60, %62 in 1 : vector<8x8xf32>, vector<8x8xf32>, vector<8x8xf32>, vector<8x8xf32> -> vector<8x32xf32>
    %c0_15 = arith.constant 0 : index
    %c0_16 = arith.constant 0 : index
    %c0_17 = arith.constant 0 : index
    %64 = vector.load %arg3[%c0_15, %c0_16, %c0_17] : memref<2x32x32xf32, #tpu.memory_space<vmem>>, vector<1x32x32xf32>
    %65 = vector.shape_cast %64 : vector<1x32x32xf32> to vector<32x32xf32>
    %cst_18 = arith.constant dense<0.000000e+00> : vector<8x32xf32>
    %66 = tpu.matmul %63, %65, %cst_18 {dimension_numbers = #tpu.dot_dimension_numbers<[1], [0], [0], [1], [0, 0, 1, 1], [], []>} : vector<8x32xf32>, vector<32x32xf32>, vector<8x32xf32> -> vector<8x32xf32>
    %67 = vector.broadcast %7 : vector<1x32xf32> to vector<8x32xf32>
    %68 = arith.addf %66, %67 : vector<8x32xf32>
    %69 = arith.addf %4, %68 : vector<8x32xf32>
    %cst_19 = arith.constant dense<0.000000e+00> : vector<8xf32>
    %70 = vector.multi_reduction <add>, %69, %cst_19 [1] : vector<8x32xf32> to vector<8xf32>
    %71 = vector.shape_cast %70 : vector<8xf32> to vector<8x1xf32>
    %cst_20 = arith.constant 3.200000e+01 : f32
    %72 = vector.broadcast %cst_20 : f32 to vector<8x1xf32>
    %73 = arith.divf %71, %72 : vector<8x1xf32>
    %74 = vector.broadcast %73 : vector<8x1xf32> to vector<8x32xf32>
    %75 = arith.subf %69, %74 : vector<8x32xf32>
    %76 = arith.mulf %75, %75 : vector<8x32xf32>
    %cst_21 = arith.constant dense<0.000000e+00> : vector<8xf32>
    %77 = vector.multi_reduction <add>, %76, %cst_21 [1] : vector<8x32xf32> to vector<8xf32>
    %78 = vector.shape_cast %77 : vector<8xf32> to vector<8x1xf32>
    %cst_22 = arith.constant 3.200000e+01 : f32
    %79 = vector.broadcast %cst_22 : f32 to vector<8x1xf32>
    %80 = arith.divf %78, %79 : vector<8x1xf32>
    %81 = vector.broadcast %73 : vector<8x1xf32> to vector<8x32xf32>
    %82 = arith.subf %69, %81 : vector<8x32xf32>
    %cst_23 = arith.constant 9.99999997E-7 : f32
    %83 = vector.broadcast %cst_23 : f32 to vector<8x1xf32>
    %84 = arith.addf %80, %83 : vector<8x1xf32>
    %85 = math.rsqrt %84 : vector<8x1xf32>
    %86 = vector.broadcast %85 : vector<8x1xf32> to vector<8x32xf32>
    %87 = arith.mulf %82, %86 : vector<8x32xf32>
    %88 = vector.broadcast %8 : vector<1x32xf32> to vector<8x32xf32>
    %89 = arith.mulf %87, %88 : vector<8x32xf32>
    %90 = vector.broadcast %9 : vector<1x32xf32> to vector<8x32xf32>
    %91 = arith.addf %89, %90 : vector<8x32xf32>
    %c0_24 = arith.constant 0 : index
    %c0_25 = arith.constant 0 : index
    %c0_26 = arith.constant 0 : index
    %92 = vector.load %arg5[%c0_24, %c0_25, %c0_26] : memref<2x32x64xf32, #tpu.memory_space<vmem>>, vector<1x32x64xf32>
    %93 = vector.shape_cast %92 : vector<1x32x64xf32> to vector<32x64xf32>
    %cst_27 = arith.constant dense<0.000000e+00> : vector<8x64xf32>
    %94 = tpu.matmul %91, %93, %cst_27 {dimension_numbers = #tpu.dot_dimension_numbers<[1], [0], [0], [1], [0, 0, 1, 1], [], []>} : vector<8x32xf32>, vector<32x64xf32>, vector<8x64xf32> -> vector<8x64xf32>
    %c0_28 = arith.constant 0 : index
    %c0_29 = arith.constant 0 : index
    %c0_30 = arith.constant 0 : index
    %95 = vector.load %arg6[%c0_28, %c0_29, %c0_30] : memref<2x1x64xf32, #tpu.memory_space<vmem>>, vector<1x1x64xf32>
    %96 = vector.shape_cast %95 : vector<1x1x64xf32> to vector<1x64xf32>
    %97 = vector.broadcast %96 : vector<1x64xf32> to vector<8x64xf32>
    %98 = arith.addf %94, %97 : vector<8x64xf32>
    %cst_31 = arith.constant 0.000000e+00 : f32
    %99 = vector.broadcast %cst_31 : f32 to vector<8x64xf32>
    %100 = arith.maximumf %98, %99 : vector<8x64xf32>
    %c0_32 = arith.constant 0 : index
    %c0_33 = arith.constant 0 : index
    %c0_34 = arith.constant 0 : index
    %101 = vector.load %arg7[%c0_32, %c0_33, %c0_34] : memref<2x64x32xf32, #tpu.memory_space<vmem>>, vector<1x64x32xf32>
    %102 = vector.shape_cast %101 : vector<1x64x32xf32> to vector<64x32xf32>
    %cst_35 = arith.constant dense<0.000000e+00> : vector<8x32xf32>
    %103 = tpu.matmul %100, %102, %cst_35 {dimension_numbers = #tpu.dot_dimension_numbers<[1], [0], [0], [1], [0, 0, 1, 1], [], []>} : vector<8x64xf32>, vector<64x32xf32>, vector<8x32xf32> -> vector<8x32xf32>
    %104 = vector.broadcast %10 : vector<1x32xf32> to vector<8x32xf32>
    %105 = arith.addf %103, %104 : vector<8x32xf32>
    %106 = arith.addf %91, %105 : vector<8x32xf32>
    %cst_36 = arith.constant dense<0.000000e+00> : vector<8xf32>
    %107 = vector.multi_reduction <add>, %106, %cst_36 [1] : vector<8x32xf32> to vector<8xf32>
    %108 = vector.shape_cast %107 : vector<8xf32> to vector<8x1xf32>
    %cst_37 = arith.constant 3.200000e+01 : f32
    %109 = vector.broadcast %cst_37 : f32 to vector<8x1xf32>
    %110 = arith.divf %108, %109 : vector<8x1xf32>
    %111 = vector.broadcast %110 : vector<8x1xf32> to vector<8x32xf32>
    %112 = arith.subf %106, %111 : vector<8x32xf32>
    %113 = arith.mulf %112, %112 : vector<8x32xf32>
    %cst_38 = arith.constant dense<0.000000e+00> : vector<8xf32>
    %114 = vector.multi_reduction <add>, %113, %cst_38 [1] : vector<8x32xf32> to vector<8xf32>
    %115 = vector.shape_cast %114 : vector<8xf32> to vector<8x1xf32>
    %cst_39 = arith.constant 3.200000e+01 : f32
    %116 = vector.broadcast %cst_39 : f32 to vector<8x1xf32>
    %117 = arith.divf %115, %116 : vector<8x1xf32>
    %118 = vector.broadcast %110 : vector<8x1xf32> to vector<8x32xf32>
    %119 = arith.subf %106, %118 : vector<8x32xf32>
    %cst_40 = arith.constant 9.99999997E-7 : f32
    %120 = vector.broadcast %cst_40 : f32 to vector<8x1xf32>
    %121 = arith.addf %117, %120 : vector<8x1xf32>
    %122 = math.rsqrt %121 : vector<8x1xf32>
    %123 = vector.broadcast %122 : vector<8x1xf32> to vector<8x32xf32>
    %124 = arith.mulf %119, %123 : vector<8x32xf32>
    %125 = vector.broadcast %11 : vector<1x32xf32> to vector<8x32xf32>
    %126 = arith.mulf %124, %125 : vector<8x32xf32>
    %127 = vector.broadcast %12 : vector<1x32xf32> to vector<8x32xf32>
    %128 = arith.addf %126, %127 : vector<8x32xf32>
    %c1 = arith.constant 1 : index
    %c0_41 = arith.constant 0 : index
    %c0_42 = arith.constant 0 : index
    %129 = vector.load %arg4[%c1, %c0_41, %c0_42] : memref<2x8x32xf32, #tpu.memory_space<vmem>>, vector<1x8x32xf32>
    %130 = vector.shape_cast %129 : vector<1x8x32xf32> to vector<8x32xf32>
    %131 = vector.extract_strided_slice %130 {offsets = [0, 0], sizes = [1, 32], strides = [1, 1]} : vector<8x32xf32> to vector<1x32xf32>
    %132 = vector.extract_strided_slice %130 {offsets = [1, 0], sizes = [1, 32], strides = [1, 1]} : vector<8x32xf32> to vector<1x32xf32>
    %133 = vector.extract_strided_slice %130 {offsets = [2, 0], sizes = [1, 32], strides = [1, 1]} : vector<8x32xf32> to vector<1x32xf32>
    %134 = vector.extract_strided_slice %130 {offsets = [3, 0], sizes = [1, 32], strides = [1, 1]} : vector<8x32xf32> to vector<1x32xf32>
    %135 = vector.extract_strided_slice %130 {offsets = [4, 0], sizes = [1, 32], strides = [1, 1]} : vector<8x32xf32> to vector<1x32xf32>
    %136 = vector.extract_strided_slice %130 {offsets = [5, 0], sizes = [1, 32], strides = [1, 1]} : vector<8x32xf32> to vector<1x32xf32>
    %c1_43 = arith.constant 1 : index
    %c0_44 = arith.constant 0 : index
    %c0_45 = arith.constant 0 : index
    %137 = vector.load %arg2[%c1_43, %c0_44, %c0_45] : memref<2x32x96xf32, #tpu.memory_space<vmem>>, vector<1x32x96xf32>
    %138 = vector.shape_cast %137 : vector<1x32x96xf32> to vector<32x96xf32>
    %cst_46 = arith.constant dense<0.000000e+00> : vector<8x96xf32>
    %139 = tpu.matmul %128, %138, %cst_46 {dimension_numbers = #tpu.dot_dimension_numbers<[1], [0], [0], [1], [0, 0, 1, 1], [], []>} : vector<8x32xf32>, vector<32x96xf32>, vector<8x96xf32> -> vector<8x96xf32>
    %140 = vector.extract_strided_slice %139 {offsets = [0, 0], sizes = [8, 8], strides = [1, 1]} : vector<8x96xf32> to vector<8x8xf32>
    %141 = vector.extract_strided_slice %139 {offsets = [0, 8], sizes = [8, 8], strides = [1, 1]} : vector<8x96xf32> to vector<8x8xf32>
    %142 = vector.extract_strided_slice %139 {offsets = [0, 16], sizes = [8, 8], strides = [1, 1]} : vector<8x96xf32> to vector<8x8xf32>
    %143 = vector.extract_strided_slice %139 {offsets = [0, 24], sizes = [8, 8], strides = [1, 1]} : vector<8x96xf32> to vector<8x8xf32>
    %144 = vector.shape_cast %140 : vector<8x8xf32> to vector<1x8x8xf32>
    %145 = vector.shape_cast %141 : vector<8x8xf32> to vector<1x8x8xf32>
    %146 = vector.shape_cast %142 : vector<8x8xf32> to vector<1x8x8xf32>
    %147 = vector.shape_cast %143 : vector<8x8xf32> to vector<1x8x8xf32>
    %148 = tpu.concatenate %144, %145, %146, %147 in 0 : vector<1x8x8xf32>, vector<1x8x8xf32>, vector<1x8x8xf32>, vector<1x8x8xf32> -> vector<4x8x8xf32>
    %149 = vector.extract_strided_slice %139 {offsets = [0, 32], sizes = [8, 8], strides = [1, 1]} : vector<8x96xf32> to vector<8x8xf32>
    %150 = vector.extract_strided_slice %139 {offsets = [0, 40], sizes = [8, 8], strides = [1, 1]} : vector<8x96xf32> to vector<8x8xf32>
    %151 = vector.extract_strided_slice %139 {offsets = [0, 48], sizes = [8, 8], strides = [1, 1]} : vector<8x96xf32> to vector<8x8xf32>
    %152 = vector.extract_strided_slice %139 {offsets = [0, 56], sizes = [8, 8], strides = [1, 1]} : vector<8x96xf32> to vector<8x8xf32>
    %153 = vector.shape_cast %149 : vector<8x8xf32> to vector<1x8x8xf32>
    %154 = vector.shape_cast %150 : vector<8x8xf32> to vector<1x8x8xf32>
    %155 = vector.shape_cast %151 : vector<8x8xf32> to vector<1x8x8xf32>
    %156 = vector.shape_cast %152 : vector<8x8xf32> to vector<1x8x8xf32>
    %157 = tpu.concatenate %153, %154, %155, %156 in 0 : vector<1x8x8xf32>, vector<1x8x8xf32>, vector<1x8x8xf32>, vector<1x8x8xf32> -> vector<4x8x8xf32>
    %158 = vector.extract_strided_slice %139 {offsets = [0, 64], sizes = [8, 8], strides = [1, 1]} : vector<8x96xf32> to vector<8x8xf32>
    %159 = vector.extract_strided_slice %139 {offsets = [0, 72], sizes = [8, 8], strides = [1, 1]} : vector<8x96xf32> to vector<8x8xf32>
    %160 = vector.extract_strided_slice %139 {offsets = [0, 80], sizes = [8, 8], strides = [1, 1]} : vector<8x96xf32> to vector<8x8xf32>
    %161 = vector.extract_strided_slice %139 {offsets = [0, 88], sizes = [8, 8], strides = [1, 1]} : vector<8x96xf32> to vector<8x8xf32>
    %162 = vector.shape_cast %158 : vector<8x8xf32> to vector<1x8x8xf32>
    %163 = vector.shape_cast %159 : vector<8x8xf32> to vector<1x8x8xf32>
    %164 = vector.shape_cast %160 : vector<8x8xf32> to vector<1x8x8xf32>
    %165 = vector.shape_cast %161 : vector<8x8xf32> to vector<1x8x8xf32>
    %166 = tpu.concatenate %162, %163, %164, %165 in 0 : vector<1x8x8xf32>, vector<1x8x8xf32>, vector<1x8x8xf32>, vector<1x8x8xf32> -> vector<4x8x8xf32>
    "tpu.trace_start"() <{level = 10 : i32, message = "hqd,hkd->hqk"}> : () -> ()
    %cst_47 = arith.constant dense<0.000000e+00> : vector<4x8x8xf32>
    %167 = tpu.matmul %148, %157, %cst_47 {dimension_numbers = #tpu.dot_dimension_numbers<[2], [2], [1], [1], [0, 0, 0, 1, 1, 1], [0], [0]>} : vector<4x8x8xf32>, vector<4x8x8xf32>, vector<4x8x8xf32> -> vector<4x8x8xf32>
    "tpu.trace_stop"() : () -> ()
    %cst_48 = arith.constant dense<0xFF800000> : vector<4x8xf32>
    %168 = vector.multi_reduction <maximumf>, %167, %cst_48 [2] : vector<4x8x8xf32> to vector<4x8xf32>
    %169 = vector.shape_cast %168 : vector<4x8xf32> to vector<4x8x1xf32>
    %170 = vector.broadcast %169 : vector<4x8x1xf32> to vector<4x8x8xf32>
    %171 = arith.subf %167, %170 : vector<4x8x8xf32>
    %172 = math.exp %171 : vector<4x8x8xf32>
    %cst_49 = arith.constant dense<0.000000e+00> : vector<4x8xf32>
    %173 = vector.multi_reduction <add>, %172, %cst_49 [2] : vector<4x8x8xf32> to vector<4x8xf32>
    %174 = vector.shape_cast %173 : vector<4x8xf32> to vector<4x8x1xf32>
    %175 = tpu.reciprocal %174 {approx = true} : vector<4x8x1xf32> -> vector<4x8x1xf32>
    %176 = vector.broadcast %175 : vector<4x8x1xf32> to vector<4x8x8xf32>
    %177 = arith.mulf %172, %176 : vector<4x8x8xf32>
    "tpu.trace_start"() <{level = 10 : i32, message = "hqk,hkd->hqd"}> : () -> ()
    %cst_50 = arith.constant dense<0.000000e+00> : vector<4x8x8xf32>
    %178 = tpu.matmul %177, %166, %cst_50 {dimension_numbers = #tpu.dot_dimension_numbers<[2], [1], [1], [2], [0, 0, 0, 1, 1, 2], [0], [0]>} : vector<4x8x8xf32>, vector<4x8x8xf32>, vector<4x8x8xf32> -> vector<4x8x8xf32>
    "tpu.trace_stop"() : () -> ()
    %179 = vector.extract_strided_slice %178 {offsets = [0, 0, 0], sizes = [1, 8, 8], strides = [1, 1, 1]} : vector<4x8x8xf32> to vector<1x8x8xf32>
    %180 = vector.shape_cast %179 : vector<1x8x8xf32> to vector<8x8xf32>
    %181 = vector.extract_strided_slice %178 {offsets = [1, 0, 0], sizes = [1, 8, 8], strides = [1, 1, 1]} : vector<4x8x8xf32> to vector<1x8x8xf32>
    %182 = vector.shape_cast %181 : vector<1x8x8xf32> to vector<8x8xf32>
    %183 = vector.extract_strided_slice %178 {offsets = [2, 0, 0], sizes = [1, 8, 8], strides = [1, 1, 1]} : vector<4x8x8xf32> to vector<1x8x8xf32>
    %184 = vector.shape_cast %183 : vector<1x8x8xf32> to vector<8x8xf32>
    %185 = vector.extract_strided_slice %178 {offsets = [3, 0, 0], sizes = [1, 8, 8], strides = [1, 1, 1]} : vector<4x8x8xf32> to vector<1x8x8xf32>
    %186 = vector.shape_cast %185 : vector<1x8x8xf32> to vector<8x8xf32>
    %187 = tpu.concatenate %180, %182, %184, %186 in 1 : vector<8x8xf32>, vector<8x8xf32>, vector<8x8xf32>, vector<8x8xf32> -> vector<8x32xf32>
    %c1_51 = arith.constant 1 : index
    %c0_52 = arith.constant 0 : index
    %c0_53 = arith.constant 0 : index
    %188 = vector.load %arg3[%c1_51, %c0_52, %c0_53] : memref<2x32x32xf32, #tpu.memory_space<vmem>>, vector<1x32x32xf32>
    %189 = vector.shape_cast %188 : vector<1x32x32xf32> to vector<32x32xf32>
    %cst_54 = arith.constant dense<0.000000e+00> : vector<8x32xf32>
    %190 = tpu.matmul %187, %189, %cst_54 {dimension_numbers = #tpu.dot_dimension_numbers<[1], [0], [0], [1], [0, 0, 1, 1], [], []>} : vector<8x32xf32>, vector<32x32xf32>, vector<8x32xf32> -> vector<8x32xf32>
    %191 = vector.broadcast %131 : vector<1x32xf32> to vector<8x32xf32>
    %192 = arith.addf %190, %191 : vector<8x32xf32>
    %193 = arith.addf %128, %192 : vector<8x32xf32>
    %cst_55 = arith.constant dense<0.000000e+00> : vector<8xf32>
    %194 = vector.multi_reduction <add>, %193, %cst_55 [1] : vector<8x32xf32> to vector<8xf32>
    %195 = vector.shape_cast %194 : vector<8xf32> to vector<8x1xf32>
    %cst_56 = arith.constant 3.200000e+01 : f32
    %196 = vector.broadcast %cst_56 : f32 to vector<8x1xf32>
    %197 = arith.divf %195, %196 : vector<8x1xf32>
    %198 = vector.broadcast %197 : vector<8x1xf32> to vector<8x32xf32>
    %199 = arith.subf %193, %198 : vector<8x32xf32>
    %200 = arith.mulf %199, %199 : vector<8x32xf32>
    %cst_57 = arith.constant dense<0.000000e+00> : vector<8xf32>
    %201 = vector.multi_reduction <add>, %200, %cst_57 [1] : vector<8x32xf32> to vector<8xf32>
    %202 = vector.shape_cast %201 : vector<8xf32> to vector<8x1xf32>
    %cst_58 = arith.constant 3.200000e+01 : f32
    %203 = vector.broadcast %cst_58 : f32 to vector<8x1xf32>
    %204 = arith.divf %202, %203 : vector<8x1xf32>
    %205 = vector.broadcast %197 : vector<8x1xf32> to vector<8x32xf32>
    %206 = arith.subf %193, %205 : vector<8x32xf32>
    %cst_59 = arith.constant 9.99999997E-7 : f32
    %207 = vector.broadcast %cst_59 : f32 to vector<8x1xf32>
    %208 = arith.addf %204, %207 : vector<8x1xf32>
    %209 = math.rsqrt %208 : vector<8x1xf32>
    %210 = vector.broadcast %209 : vector<8x1xf32> to vector<8x32xf32>
    %211 = arith.mulf %206, %210 : vector<8x32xf32>
    %212 = vector.broadcast %132 : vector<1x32xf32> to vector<8x32xf32>
    %213 = arith.mulf %211, %212 : vector<8x32xf32>
    %214 = vector.broadcast %133 : vector<1x32xf32> to vector<8x32xf32>
    %215 = arith.addf %213, %214 : vector<8x32xf32>
    %c1_60 = arith.constant 1 : index
    %c0_61 = arith.constant 0 : index
    %c0_62 = arith.constant 0 : index
    %216 = vector.load %arg5[%c1_60, %c0_61, %c0_62] : memref<2x32x64xf32, #tpu.memory_space<vmem>>, vector<1x32x64xf32>
    %217 = vector.shape_cast %216 : vector<1x32x64xf32> to vector<32x64xf32>
    %cst_63 = arith.constant dense<0.000000e+00> : vector<8x64xf32>
    %218 = tpu.matmul %215, %217, %cst_63 {dimension_numbers = #tpu.dot_dimension_numbers<[1], [0], [0], [1], [0, 0, 1, 1], [], []>} : vector<8x32xf32>, vector<32x64xf32>, vector<8x64xf32> -> vector<8x64xf32>
    %c1_64 = arith.constant 1 : index
    %c0_65 = arith.constant 0 : index
    %c0_66 = arith.constant 0 : index
    %219 = vector.load %arg6[%c1_64, %c0_65, %c0_66] : memref<2x1x64xf32, #tpu.memory_space<vmem>>, vector<1x1x64xf32>
    %220 = vector.shape_cast %219 : vector<1x1x64xf32> to vector<1x64xf32>
    %221 = vector.broadcast %220 : vector<1x64xf32> to vector<8x64xf32>
    %222 = arith.addf %218, %221 : vector<8x64xf32>
    %cst_67 = arith.constant 0.000000e+00 : f32
    %223 = vector.broadcast %cst_67 : f32 to vector<8x64xf32>
    %224 = arith.maximumf %222, %223 : vector<8x64xf32>
    %c1_68 = arith.constant 1 : index
    %c0_69 = arith.constant 0 : index
    %c0_70 = arith.constant 0 : index
    %225 = vector.load %arg7[%c1_68, %c0_69, %c0_70] : memref<2x64x32xf32, #tpu.memory_space<vmem>>, vector<1x64x32xf32>
    %226 = vector.shape_cast %225 : vector<1x64x32xf32> to vector<64x32xf32>
    %cst_71 = arith.constant dense<0.000000e+00> : vector<8x32xf32>
    %227 = tpu.matmul %224, %226, %cst_71 {dimension_numbers = #tpu.dot_dimension_numbers<[1], [0], [0], [1], [0, 0, 1, 1], [], []>} : vector<8x64xf32>, vector<64x32xf32>, vector<8x32xf32> -> vector<8x32xf32>
    %228 = vector.broadcast %134 : vector<1x32xf32> to vector<8x32xf32>
    %229 = arith.addf %227, %228 : vector<8x32xf32>
    %230 = arith.addf %215, %229 : vector<8x32xf32>
    %cst_72 = arith.constant dense<0.000000e+00> : vector<8xf32>
    %231 = vector.multi_reduction <add>, %230, %cst_72 [1] : vector<8x32xf32> to vector<8xf32>
    %232 = vector.shape_cast %231 : vector<8xf32> to vector<8x1xf32>
    %cst_73 = arith.constant 3.200000e+01 : f32
    %233 = vector.broadcast %cst_73 : f32 to vector<8x1xf32>
    %234 = arith.divf %232, %233 : vector<8x1xf32>
    %235 = vector.broadcast %234 : vector<8x1xf32> to vector<8x32xf32>
    %236 = arith.subf %230, %235 : vector<8x32xf32>
    %237 = arith.mulf %236, %236 : vector<8x32xf32>
    %cst_74 = arith.constant dense<0.000000e+00> : vector<8xf32>
    %238 = vector.multi_reduction <add>, %237, %cst_74 [1] : vector<8x32xf32> to vector<8xf32>
    %239 = vector.shape_cast %238 : vector<8xf32> to vector<8x1xf32>
    %cst_75 = arith.constant 3.200000e+01 : f32
    %240 = vector.broadcast %cst_75 : f32 to vector<8x1xf32>
    %241 = arith.divf %239, %240 : vector<8x1xf32>
    %242 = vector.broadcast %234 : vector<8x1xf32> to vector<8x32xf32>
    %243 = arith.subf %230, %242 : vector<8x32xf32>
    %cst_76 = arith.constant 9.99999997E-7 : f32
    %244 = vector.broadcast %cst_76 : f32 to vector<8x1xf32>
    %245 = arith.addf %241, %244 : vector<8x1xf32>
    %246 = math.rsqrt %245 : vector<8x1xf32>
    %247 = vector.broadcast %246 : vector<8x1xf32> to vector<8x32xf32>
    %248 = arith.mulf %243, %247 : vector<8x32xf32>
    %249 = vector.broadcast %135 : vector<1x32xf32> to vector<8x32xf32>
    %250 = arith.mulf %248, %249 : vector<8x32xf32>
    %251 = vector.broadcast %136 : vector<1x32xf32> to vector<8x32xf32>
    %252 = arith.addf %250, %251 : vector<8x32xf32>
    %c0_77 = arith.constant 0 : index
    %c0_78 = arith.constant 0 : index
    %253 = vector.load %arg8[%c0_77, %c0_78] : memref<32x128xf32, #tpu.memory_space<vmem>>, vector<32x128xf32>
    %cst_79 = arith.constant dense<0.000000e+00> : vector<8x128xf32>
    %254 = tpu.matmul %252, %253, %cst_79 {dimension_numbers = #tpu.dot_dimension_numbers<[1], [0], [0], [1], [0, 0, 1, 1], [], []>} : vector<8x32xf32>, vector<32x128xf32>, vector<8x128xf32> -> vector<8x128xf32>
    %cst_80 = arith.constant dense<0.000000e+00> : vector<128xf32>
    %255 = vector.multi_reduction <add>, %254, %cst_80 [0] : vector<8x128xf32> to vector<128xf32>
    %256 = vector.shape_cast %255 : vector<128xf32> to vector<1x128xf32>
    %cst_81 = arith.constant 8.000000e+00 : f32
    %257 = vector.broadcast %cst_81 : f32 to vector<1x128xf32>
    %258 = arith.divf %256, %257 : vector<1x128xf32>
    %259 = vector.broadcast %258 : vector<1x128xf32> to vector<8x128xf32>
    %260 = arith.subf %254, %259 : vector<8x128xf32>
    %261 = arith.mulf %260, %260 : vector<8x128xf32>
    %cst_82 = arith.constant dense<0.000000e+00> : vector<128xf32>
    %262 = vector.multi_reduction <add>, %261, %cst_82 [0] : vector<8x128xf32> to vector<128xf32>
    %263 = vector.shape_cast %262 : vector<128xf32> to vector<1x128xf32>
    %cst_83 = arith.constant 8.000000e+00 : f32
    %264 = vector.broadcast %cst_83 : f32 to vector<1x128xf32>
    %265 = arith.divf %263, %264 : vector<1x128xf32>
    %c0_84 = arith.constant 0 : index
    %c0_85 = arith.constant 0 : index
    %266 = vector.load %arg9[%c0_84, %c0_85] : memref<2x128xf32, #tpu.memory_space<vmem>>, vector<1x128xf32>
    %c1_86 = arith.constant 1 : index
    %c0_87 = arith.constant 0 : index
    %267 = vector.load %arg9[%c1_86, %c0_87] : memref<2x128xf32, #tpu.memory_space<vmem>>, vector<1x128xf32>
    %268 = vector.broadcast %258 : vector<1x128xf32> to vector<8x128xf32>
    %269 = arith.subf %254, %268 : vector<8x128xf32>
    %cst_88 = arith.constant 9.99999974E-6 : f32
    %270 = vector.broadcast %cst_88 : f32 to vector<1x128xf32>
    %271 = arith.addf %265, %270 : vector<1x128xf32>
    %272 = math.rsqrt %271 : vector<1x128xf32>
    %273 = vector.broadcast %272 : vector<1x128xf32> to vector<8x128xf32>
    %274 = arith.mulf %269, %273 : vector<8x128xf32>
    %275 = vector.broadcast %266 : vector<1x128xf32> to vector<8x128xf32>
    %276 = arith.mulf %274, %275 : vector<8x128xf32>
    %277 = vector.broadcast %267 : vector<1x128xf32> to vector<8x128xf32>
    %278 = arith.addf %276, %277 : vector<8x128xf32>
    %cst_89 = arith.constant 0.000000e+00 : f32
    %279 = vector.broadcast %cst_89 : f32 to vector<8x128xf32>
    %280 = arith.maximumf %278, %279 : vector<8x128xf32>
    %c0_90 = arith.constant 0 : index
    %c0_91 = arith.constant 0 : index
    %281 = vector.load %arg10[%c0_90, %c0_91] : memref<8x128xf32, #tpu.memory_space<vmem>>, vector<8x128xf32>
    tpu.vector_store %arg10[%c0_90, %c0_91], %280 {strides = array<i32>} : memref<8x128xf32, #tpu.memory_space<vmem>>, vector<8x128xf32>,
    return
  }
}

</mosaic_0001>

<llo_original>
// kernel: tpu_custom_call.1
$region0: #{tpu_custom_call.1}
  #allocation0 [shape = 'u32[]', space=smem, size = 0x4, offset = 0x4, fixed_abs, tag = 'smem constant byte address 0x4 - core index']
  #allocation1 [shape = 'u32[144,128]{1,0:T(1,128)}', space=vmem, size = 0x12000, scoped, tag = 'internal scratch']
  %s0 = inlined_call_operand.vmem [shape: f32[8,4], index: 0, kind: input, shape index: {}]
  %s1 = inlined_call_operand.hbm [shape: f32[4,32], index: 1, kind: input, shape index: {}]
  %s2 = inlined_call_operand.vmem [shape: f32[2,32,96], index: 2, kind: input, shape index: {}]
  %s3 = inlined_call_operand.vmem [shape: f32[2,32,32], index: 3, kind: input, shape index: {}]
  %s4 = inlined_call_operand.hbm [shape: f32[2,8,32], index: 4, kind: input, shape index: {}]
  %s5 = inlined_call_operand.vmem [shape: f32[2,32,64], index: 5, kind: input, shape index: {}]
  %s6 = inlined_call_operand.vmem [shape: f32[2,1,64], index: 6, kind: input, shape index: {}]
  %s7 = inlined_call_operand.vmem [shape: f32[2,64,32], index: 7, kind: input, shape index: {}]
  %s8 = inlined_call_operand.vmem [shape: f32[32,128], index: 8, kind: input, shape index: {}]
  %s9 = inlined_call_operand.vmem [shape: f32[2,128], index: 9, kind: input, shape index: {}]
  %s10 = inlined_call_operand.hbm [shape: f32[8,128], index: 10, kind: output, shape index: {}]
  %s11 = sld [smem:[#allocation0]]
  $region58: #{tpu_custom_call.1} parent=0
    _
  %s13 = ssub.s32 1, %s11
  %s14 = scalar_select 0, %s13, %s11
  $region1: #{tpu_custom_call.1} parent=0
    #allocation2 [shape = 'u8[2048]{0}', space=vmem, size = 0x800, scoped, tag = 'input window, operand 1, single buffered']
    #allocation3 [shape = 's32[1]{0}', space=sflag, size = 0x4, scoped, tag = 'scoped memory for tpu_custom_call.1']
    #allocation4 [shape = 's32[1]{0}', space=sflag, size = 0x4, scoped, tag = 'scoped memory for tpu_custom_call.1']
    #allocation5 [shape = 'u8[8192]{0}', space=vmem, size = 0x2000, scoped, tag = 'input window, operand 4, single buffered']
    #allocation6 [shape = 's32[1]{0}', space=sflag, size = 0x4, scoped, tag = 'scoped memory for tpu_custom_call.1']
    #allocation7 [shape = 'u8[4096]{0}', space=vmem, size = 0x1000, scoped, tag = 'output window, operand 0, single buffered']
    %15 = vsyncpa [#allocation3], 0
    %16 = vsyncpa [#allocation6], 0
    %17 = vsyncpa [#allocation4], 0
    // Predicated region
    $region2: #{tpu_custom_call.1} parent=1 // pred_check
      _
    $region3: #{tpu_custom_call.1} parent=1 // pred_check_branch
      %19 = sbr.rel (0) target = $region5
    $region4: #{tpu_custom_call.1} parent=1 // pred_region
      _
    $region5: #{tpu_custom_call.1} parent=1 // pred_fallthru
      _
    // Predicated region
    $region6: #{tpu_custom_call.1} parent=1 // pred_check
      _
    $region7: #{tpu_custom_call.1} parent=1 // pred_check_branch
      %21 = sbr.rel (0) target = $region9
    $region8: #{tpu_custom_call.1} parent=1 // pred_region
      %s23 = ssub.s32 64, 64
      %24 = vsyncadd [#allocation3], %s23
      %s26 = sshll.u32 [#allocation2], 4
      %s27 = int_to_ptr.vmem [resolvable:$true] %s26
      %29 = dma.hbm_to_vmem [thread:$0]  %s1, 64, %s27, [#allocation3]
    $region9: #{tpu_custom_call.1} parent=1 // pred_fallthru
      _
    // Predicated region
    $region10: #{tpu_custom_call.1} parent=1 // pred_check
      _
    $region11: #{tpu_custom_call.1} parent=1 // pred_check_branch
      %31 = sbr.rel (0) target = $region13
    $region12: #{tpu_custom_call.1} parent=1 // pred_region
      _
    $region13: #{tpu_custom_call.1} parent=1 // pred_fallthru
      _
    // Predicated region
    $region14: #{tpu_custom_call.1} parent=1 // pred_check
      _
    $region15: #{tpu_custom_call.1} parent=1 // pred_check_branch
      %33 = sbr.rel (0) target = $region17
    $region16: #{tpu_custom_call.1} parent=1 // pred_region
      _
    $region17: #{tpu_custom_call.1} parent=1 // pred_fallthru
      _
    // Predicated region
    $region18: #{tpu_custom_call.1} parent=1 // pred_check
      _
    $region19: #{tpu_custom_call.1} parent=1 // pred_check_branch
      %35 = sbr.rel (0) target = $region21
    $region20: #{tpu_custom_call.1} parent=1 // pred_region
      %s37 = ssub.s32 256, 256
      %38 = vsyncadd [#allocation6], %s37
      %s39 = sshll.u32 [#allocation5], 4
      %s40 = int_to_ptr.vmem [resolvable:$true] %s39
      %45 = dma.hbm_to_vmem [thread:$0]  %s4, 256, %s40, [#allocation6], 128, 128, 8
    $region21: #{tpu_custom_call.1} parent=1 // pred_fallthru
      _
    // Predicated region
    $region22: #{tpu_custom_call.1} parent=1 // pred_check
      _
    $region23: #{tpu_custom_call.1} parent=1 // pred_check_branch
      %47 = sbr.rel (0) target = $region25
    $region24: #{tpu_custom_call.1} parent=1 // pred_region
      _
    $region25: #{tpu_custom_call.1} parent=1 // pred_fallthru
      _
    // Predicated region
    $region26: #{tpu_custom_call.1} parent=1 // pred_check
      _
    $region27: #{tpu_custom_call.1} parent=1 // pred_check_branch
      %49 = sbr.rel (0) target = $region29
    $region28: #{tpu_custom_call.1} parent=1 // pred_region
      _
    $region29: #{tpu_custom_call.1} parent=1 // pred_fallthru
      _
    // Predicated region
    $region30: #{tpu_custom_call.1} parent=1 // pred_check
      _
    $region31: #{tpu_custom_call.1} parent=1 // pred_check_branch
      %51 = sbr.rel (0) target = $region33
    $region32: #{tpu_custom_call.1} parent=1 // pred_region
      _
    $region33: #{tpu_custom_call.1} parent=1 // pred_fallthru
      _
    // Predicated region
    $region34: #{tpu_custom_call.1} parent=1 // pred_check
      _
    $region35: #{tpu_custom_call.1} parent=1 // pred_check_branch
      %53 = sbr.rel (0) target = $region37
    $region36: #{tpu_custom_call.1} parent=1 // pred_region
      _
    $region37: #{tpu_custom_call.1} parent=1 // pred_fallthru
      _
    // Predicated region
    $region38: #{tpu_custom_call.1} parent=1 // pred_check
      _
    $region39: #{tpu_custom_call.1} parent=1 // pred_check_branch
      %55 = sbr.rel (0) target = $region41
    $region40: #{tpu_custom_call.1} parent=1 // pred_region
      _
    $region41: #{tpu_custom_call.1} parent=1 // pred_fallthru
      _
    // Predicated region
    $region42: #{tpu_custom_call.1} parent=1 // pred_check
      _
    $region43: #{tpu_custom_call.1} parent=1 // pred_check_branch
      %57 = sbr.rel (0) target = $region45
    $region44: #{tpu_custom_call.1} parent=1 // pred_region
      %58 = dma.done [#allocation3], 64
    $region45: #{tpu_custom_call.1} parent=1 // pred_fallthru
      _
    // Predicated region
    $region46: #{tpu_custom_call.1} parent=1 // pred_check
      _
    $region47: #{tpu_custom_call.1} parent=1 // pred_check_branch
      %60 = sbr.rel (0) target = $region49
    $region48: #{tpu_custom_call.1} parent=1 // pred_region
      %61 = dma.done [#allocation6], 256
    $region49: #{tpu_custom_call.1} parent=1 // pred_fallthru
      _
    %v62 = vld [vmem:[%s0] sm:$0xff]
    %v63 = vld [vmem:[#allocation2] sm:$0xf]
    %vm64 = vcmask 31744
    %v66 = vsel %vm64, %v62, 0
    %vm68 = vcmask 1043456
    %v70 = vsel %vm68, %v63, 0
    %72 = vmatprep.subr.mxu0 0.0
    %73 = vmatpush1.msra.mxu0 %v70
    %74 = vmatprep.subr.mxu0 0.0
    %75 = vmatpush1.msra.mxu0 0.0
    %76 = vmatprep.subr.mxu0 0.0
    %77 = vmatpush1.msra.mxu0 0.0
    %78 = vmatprep.subr.mxu0 0.0
    %79 = vmatpush1.msra.mxu0 0.0
    %80 = vmatprep.subr.mxu0 0.0
    %81 = vmatpush1.msra.mxu0 0.0
    %82 = vmatprep.subr.mxu0 0.0
    %83 = vmatpush1.msra.mxu0 0.0
    %84 = vmatprep.subr.mxu0 0.0
    %85 = vmatpush1.msra.mxu0 0.0
    %86 = vmatprep.subr.mxu0 0.0
    %87 = vmatpush1.msra.mxu0 0.0
    %88 = vmatprep.subr.mxu0 0.0
    %89 = vmatpush1.msra.mxu0 0.0
    %90 = vmatprep.subr.mxu0 0.0
    %91 = vmatpush1.msra.mxu0 0.0
    %92 = vmatprep.subr.mxu0 0.0
    %93 = vmatpush1.msra.mxu0 0.0
    %94 = vmatprep.subr.mxu0 0.0
    %95 = vmatpush1.msra.mxu0 0.0
    %96 = vmatprep.subr.mxu0 0.0
    %97 = vmatpush1.msra.mxu0 0.0
    %98 = vmatprep.subr.mxu0 0.0
    %99 = vmatpush1.msra.mxu0 0.0
    %100 = vmatprep.subr.mxu0 0.0
    %101 = vmatpush1.msra.mxu0 0.0
    %102 = vmatprep.subr.mxu0 0.0
    %103 = vmatpush1.msra.mxu0 0.0
    %104 = vmatprep.subr.mxu0 0.0
    %105 = vmatpush1.msra.mxu0 0.0
    %106 = vmatprep.subr.mxu0 0.0
    %107 = vmatpush1.msra.mxu0 0.0
    %108 = vmatprep.subr.mxu0 0.0
    %109 = vmatpush1.msra.mxu0 0.0
    %110 = vmatprep.subr.mxu0 0.0
    %111 = vmatpush1.msra.mxu0 0.0
    %112 = vmatprep.subr.mxu0 0.0
    %113 = vmatpush1.msra.mxu0 0.0
    %114 = vmatprep.subr.mxu0 0.0
    %115 = vmatpush1.msra.mxu0 0.0
    %116 = vmatprep.subr.mxu0 0.0
    %117 = vmatpush1.msra.mxu0 0.0
    %118 = vmatprep.subr.mxu0 0.0
    %119 = vmatpush1.msra.mxu0 0.0
    %120 = vmatprep.subr.mxu0 0.0
    %121 = vmatpush1.msra.mxu0 0.0
    %122 = vmatprep.subr.mxu0 0.0
    %123 = vmatpush1.msra.mxu0 0.0
    %124 = vmatprep.subr.mxu0 0.0
    %125 = vmatpush1.msra.mxu0 0.0
    %126 = vmatprep.subr.mxu0 0.0
    %127 = vmatpush1.msra.mxu0 0.0
    %128 = vmatprep.subr.mxu0 0.0
    %129 = vmatpush1.msra.mxu0 0.0
    %130 = vmatprep.subr.mxu0 0.0
    %131 = vmatpush1.msra.mxu0 0.0
    %132 = vmatprep.subr.mxu0 0.0
    %133 = vmatpush1.msra.mxu0 0.0
    %134 = vmatprep.subr.mxu0 0.0
    %135 = vmatpush1.msra.mxu0 0.0
    %136 = vmatprep.mubr.f32.mxu0 0.0
    %137 = vmatmul.mubr.f32.gmra.mrb[0].mxu0 %v66
    %v138 = vpop.f32.mrb[0].mxu0
    %v139 = vadd.f32 0.0, %v138
    %v140 = vpop.f32.mrb[0].mxu0
    %141 = vdwg.mxu0
    %v142 = vmax.f32 %v139, 0.0
    %v143 = vld [vmem:[#allocation5] sm:$0xff]
    %v144 = vld [vmem:[%s2] sm:$0xff]
    %v145 = vld [vmem:[%s2 + $0x8] sm:$0xff]
    %v146 = vld [vmem:[%s2 + $0x10] sm:$0xff]
    %v147 = vld [vmem:[%s2 + $0x18] sm:$0xff]
    %vm148 = vcmask 261120
    %v150 = vsel %vm148, %v142, 0
    %152 = vmatprep.subr.mxu0 0.0
    %153 = vmatpush1.msra.mxu0 %v144
    %154 = vmatprep.subr.mxu0 0.0
    %155 = vmatpush1.msra.mxu0 %v145
    %156 = vmatprep.subr.mxu0 0.0
    %157 = vmatpush1.msra.mxu0 %v146
    %158 = vmatprep.subr.mxu0 0.0
    %159 = vmatpush1.msra.mxu0 %v147
    %160 = vmatprep.subr.mxu0 0.0
    %161 = vmatpush1.msra.mxu0 0.0
    %162 = vmatprep.subr.mxu0 0.0
    %163 = vmatpush1.msra.mxu0 0.0
    %164 = vmatprep.subr.mxu0 0.0
    %165 = vmatpush1.msra.mxu0 0.0
    %166 = vmatprep.subr.mxu0 0.0
    %167 = vmatpush1.msra.mxu0 0.0
    %168 = vmatprep.subr.mxu0 0.0
    %169 = vmatpush1.msra.mxu0 0.0
    %170 = vmatprep.subr.mxu0 0.0
    %171 = vmatpush1.msra.mxu0 0.0
    %172 = vmatprep.subr.mxu0 0.0
    %173 = vmatpush1.msra.mxu0 0.0
    %174 = vmatprep.subr.mxu0 0.0
    %175 = vmatpush1.msra.mxu0 0.0
    %176 = vmatprep.subr.mxu0 0.0
    %177 = vmatpush1.msra.mxu0 0.0
    %178 = vmatprep.subr.mxu0 0.0
    %179 = vmatpush1.msra.mxu0 0.0
    %180 = vmatprep.subr.mxu0 0.0
    %181 = vmatpush1.msra.mxu0 0.0
    %182 = vmatprep.subr.mxu0 0.0
    %183 = vmatpush1.msra.mxu0 0.0
    %184 = vmatprep.subr.mxu0 0.0
    %185 = vmatpush1.msra.mxu0 0.0
    %186 = vmatprep.subr.mxu0 0.0
    %187 = vmatpush1.msra.mxu0 0.0
    %188 = vmatprep.subr.mxu0 0.0
    %189 = vmatpush1.msra.mxu0 0.0
    %190 = vmatprep.subr.mxu0 0.0
    %191 = vmatpush1.msra.mxu0 0.0
    %192 = vmatprep.subr.mxu0 0.0
    %193 = vmatpush1.msra.mxu0 0.0
    %194 = vmatprep.subr.mxu0 0.0
    %195 = vmatpush1.msra.mxu0 0.0
    %196 = vmatprep.subr.mxu0 0.0
    %197 = vmatpush1.msra.mxu0 0.0
    %198 = vmatprep.subr.mxu0 0.0
    %199 = vmatpush1.msra.mxu0 0.0
    %200 = vmatprep.subr.mxu0 0.0
    %201 = vmatpush1.msra.mxu0 0.0
    %202 = vmatprep.subr.mxu0 0.0
    %203 = vmatpush1.msra.mxu0 0.0
    %204 = vmatprep.subr.mxu0 0.0
    %205 = vmatpush1.msra.mxu0 0.0
    %206 = vmatprep.subr.mxu0 0.0
    %207 = vmatpush1.msra.mxu0 0.0
    %208 = vmatprep.subr.mxu0 0.0
    %209 = vmatpush1.msra.mxu0 0.0
    %210 = vmatprep.subr.mxu0 0.0
    %211 = vmatpush1.msra.mxu0 0.0
    %212 = vmatprep.subr.mxu0 0.0
    %213 = vmatpush1.msra.mxu0 0.0
    %214 = vmatprep.subr.mxu0 0.0
    %215 = vmatpush1.msra.mxu0 0.0
    %216 = vmatprep.mubr.f32.mxu0 0.0
    %217 = vmatmul.mubr.f32.gmra.mrb[0].mxu0 %v150
    %v218 = vpop.f32.mrb[0].mxu0
    %v219 = vadd.f32 0.0, %v218
    %v220 = vpop.f32.mrb[0].mxu0
    %221 = vdwg.mxu0
    %223 = vrot.lane.b32.xlu0 %v219, 120
    %v224 = vpop.permute.xlu0 %223
    %225 = vrot.lane.b32.xlu0 %v219, 112
    %v226 = vpop.permute.xlu0 %225
    %227 = vrot.lane.b32.xlu0 %v219, 104
    %v228 = vpop.permute.xlu0 %227
    %229 = vrot.lane.b32.xlu0 %v219, 96
    %v230 = vpop.permute.xlu0 %229
    %vm231 = vcmask 64512
    %v232 = vsel %vm231, %v219, 0
    %v234 = vsel %vm231, %v230, 0
    %236 = vmatprep.subr.mxu0 0.0
    %237 = vmatpush1.xpose.msra.mxu0 %v234
    %238 = vmatprep.subr.mxu0 0.0
    %239 = vmatpush1.xpose.msra.mxu0 0.0
    %240 = vmatprep.subr.mxu0 0.0
    %241 = vmatpush1.xpose.msra.mxu0 0.0
    %242 = vmatprep.subr.mxu0 0.0
    %243 = vmatpush1.xpose.msra.mxu0 0.0
    %244 = vmatprep.subr.mxu0 0.0
    %245 = vmatpush1.xpose.msra.mxu0 0.0
    %246 = vmatprep.subr.mxu0 0.0
    %247 = vmatpush1.xpose.msra.mxu0 0.0
    %248 = vmatprep.subr.mxu0 0.0
    %249 = vmatpush1.xpose.msra.mxu0 0.0
    %250 = vmatprep.subr.mxu0 0.0
    %251 = vmatpush1.xpose.msra.mxu0 0.0
    %252 = vmatprep.subr.mxu0 0.0
    %253 = vmatpush1.xpose.msra.mxu0 0.0
    %254 = vmatprep.subr.mxu0 0.0
    %255 = vmatpush1.xpose.msra.mxu0 0.0
    %256 = vmatprep.subr.mxu0 0.0
    %257 = vmatpush1.xpose.msra.mxu0 0.0
    %258 = vmatprep.subr.mxu0 0.0
    %259 = vmatpush1.xpose.msra.mxu0 0.0
    %260 = vmatprep.subr.mxu0 0.0
    %261 = vmatpush1.xpose.msra.mxu0 0.0
    %262 = vmatprep.subr.mxu0 0.0
    %263 = vmatpush1.xpose.msra.mxu0 0.0
    %264 = vmatprep.subr.mxu0 0.0
    %265 = vmatpush1.xpose.msra.mxu0 0.0
    %266 = vmatprep.subr.mxu0 0.0
    %267 = vmatpush1.xpose.msra.mxu0 0.0
    %268 = vmatprep.subr.mxu0 0.0
    %269 = vmatpush1.xpose.msra.mxu0 0.0
    %270 = vmatprep.subr.mxu0 0.0
    %271 = vmatpush1.xpose.msra.mxu0 0.0
    %272 = vmatprep.subr.mxu0 0.0
    %273 = vmatpush1.xpose.msra.mxu0 0.0
    %274 = vmatprep.subr.mxu0 0.0
    %275 = vmatpush1.xpose.msra.mxu0 0.0
    %276 = vmatprep.subr.mxu0 0.0
    %277 = vmatpush1.xpose.msra.mxu0 0.0
    %278 = vmatprep.subr.mxu0 0.0
    %279 = vmatpush1.xpose.msra.mxu0 0.0
    %280 = vmatprep.subr.mxu0 0.0
    %281 = vmatpush1.xpose.msra.mxu0 0.0
    %282 = vmatprep.subr.mxu0 0.0
    %283 = vmatpush1.xpose.msra.mxu0 0.0
    %284 = vmatprep.subr.mxu0 0.0
    %285 = vmatpush1.xpose.msra.mxu0 0.0
    %286 = vmatprep.subr.mxu0 0.0
    %287 = vmatpush1.xpose.msra.mxu0 0.0
    %288 = vmatprep.subr.mxu0 0.0
    %289 = vmatpush1.xpose.msra.mxu0 0.0
    %290 = vmatprep.subr.mxu0 0.0
    %291 = vmatpush1.xpose.msra.mxu0 0.0
    %292 = vmatprep.subr.mxu0 0.0
    %293 = vmatpush1.xpose.msra.mxu0 0.0
    %294 = vmatprep.subr.mxu0 0.0
    %295 = vmatpush1.xpose.msra.mxu0 0.0
    %296 = vmatprep.subr.mxu0 0.0
    %297 = vmatpush1.xpose.msra.mxu0 0.0
    %298 = vmatprep.subr.mxu0 0.0
    %299 = vmatpush1.xpose.msra.mxu0 0.0
    %300 = vmatprep.mubr.f32.mxu0 0.0
    %301 = vmatmul.mubr.f32.gmra.mrb[0].mxu0 %v232
    %v302 = vpop.f32.mrb[0].mxu0
    %v303 = vadd.f32 0.0, %v302
    %v304 = vpop.f32.mrb[0].mxu0
    %305 = vdwg.mxu0
    %306 = vrot.lane.b32.xlu0 %v224, 96
    %v307 = vpop.permute.xlu0 %306
    %v308 = vsel %vm231, %v224, 0
    %v310 = vsel %vm231, %v307, 0
    %312 = vmatprep.subr.mxu0 0.0
    %313 = vmatpush1.xpose.msra.mxu0 %v310
    %314 = vmatprep.subr.mxu0 0.0
    %315 = vmatpush1.xpose.msra.mxu0 0.0
    %316 = vmatprep.subr.mxu0 0.0
    %317 = vmatpush1.xpose.msra.mxu0 0.0
    %318 = vmatprep.subr.mxu0 0.0
    %319 = vmatpush1.xpose.msra.mxu0 0.0
    %320 = vmatprep.subr.mxu0 0.0
    %321 = vmatpush1.xpose.msra.mxu0 0.0
    %322 = vmatprep.subr.mxu0 0.0
    %323 = vmatpush1.xpose.msra.mxu0 0.0
    %324 = vmatprep.subr.mxu0 0.0
    %325 = vmatpush1.xpose.msra.mxu0 0.0
    %326 = vmatprep.subr.mxu0 0.0
    %327 = vmatpush1.xpose.msra.mxu0 0.0
    %328 = vmatprep.subr.mxu0 0.0
    %329 = vmatpush1.xpose.msra.mxu0 0.0
    %330 = vmatprep.subr.mxu0 0.0
    %331 = vmatpush1.xpose.msra.mxu0 0.0
    %332 = vmatprep.subr.mxu0 0.0
    %333 = vmatpush1.xpose.msra.mxu0 0.0
    %334 = vmatprep.subr.mxu0 0.0
    %335 = vmatpush1.xpose.msra.mxu0 0.0
    %336 = vmatprep.subr.mxu0 0.0
    %337 = vmatpush1.xpose.msra.mxu0 0.0
    %338 = vmatprep.subr.mxu0 0.0
    %339 = vmatpush1.xpose.msra.mxu0 0.0
    %340 = vmatprep.subr.mxu0 0.0
    %341 = vmatpush1.xpose.msra.mxu0 0.0
    %342 = vmatprep.subr.mxu0 0.0
    %343 = vmatpush1.xpose.msra.mxu0 0.0
    %344 = vmatprep.subr.mxu0 0.0
    %345 = vmatpush1.xpose.msra.mxu0 0.0
    %346 = vmatprep.subr.mxu0 0.0
    %347 = vmatpush1.xpose.msra.mxu0 0.0
    %348 = vmatprep.subr.mxu0 0.0
    %349 = vmatpush1.xpose.msra.mxu0 0.0
    %350 = vmatprep.subr.mxu0 0.0
    %351 = vmatpush1.xpose.msra.mxu0 0.0
    %352 = vmatprep.subr.mxu0 0.0
    %353 = vmatpush1.xpose.msra.mxu0 0.0
    %354 = vmatprep.subr.mxu0 0.0
    %355 = vmatpush1.xpose.msra.mxu0 0.0
    %356 = vmatprep.subr.mxu0 0.0
    %357 = vmatpush1.xpose.msra.mxu0 0.0
    %358 = vmatprep.subr.mxu0 0.0
    %359 = vmatpush1.xpose.msra.mxu0 0.0
    %360 = vmatprep.subr.mxu0 0.0
    %361 = vmatpush1.xpose.msra.mxu0 0.0
    %362 = vmatprep.subr.mxu0 0.0
    %363 = vmatpush1.xpose.msra.mxu0 0.0
    %364 = vmatprep.subr.mxu0 0.0
    %365 = vmatpush1.xpose.msra.mxu0 0.0
    %366 = vmatprep.subr.mxu0 0.0
    %367 = vmatpush1.xpose.msra.mxu0 0.0
    %368 = vmatprep.subr.mxu0 0.0
    %369 = vmatpush1.xpose.msra.mxu0 0.0
    %370 = vmatprep.subr.mxu0 0.0
    %371 = vmatpush1.xpose.msra.mxu0 0.0
    %372 = vmatprep.subr.mxu0 0.0
    %373 = vmatpush1.xpose.msra.mxu0 0.0
    %374 = vmatprep.subr.mxu0 0.0
    %375 = vmatpush1.xpose.msra.mxu0 0.0
    %376 = vmatprep.mubr.f32.mxu0 0.0
    %377 = vmatmul.mubr.f32.gmra.mrb[0].mxu0 %v308
    %v378 = vpop.f32.mrb[0].mxu0
    %v379 = vadd.f32 0.0, %v378
    %v380 = vpop.f32.mrb[0].mxu0
    %381 = vdwg.mxu0
    %382 = vrot.lane.b32.xlu0 %v226, 96
    %v383 = vpop.permute.xlu0 %382
    %v384 = vsel %vm231, %v226, 0
    %v386 = vsel %vm231, %v383, 0
    %388 = vmatprep.subr.mxu0 0.0
    %389 = vmatpush1.xpose.msra.mxu0 %v386
    %390 = vmatprep.subr.mxu0 0.0
    %391 = vmatpush1.xpose.msra.mxu0 0.0
    %392 = vmatprep.subr.mxu0 0.0
    %393 = vmatpush1.xpose.msra.mxu0 0.0
    %394 = vmatprep.subr.mxu0 0.0
    %395 = vmatpush1.xpose.msra.mxu0 0.0
    %396 = vmatprep.subr.mxu0 0.0
    %397 = vmatpush1.xpose.msra.mxu0 0.0
    %398 = vmatprep.subr.mxu0 0.0
    %399 = vmatpush1.xpose.msra.mxu0 0.0
    %400 = vmatprep.subr.mxu0 0.0
    %401 = vmatpush1.xpose.msra.mxu0 0.0
    %402 = vmatprep.subr.mxu0 0.0
    %403 = vmatpush1.xpose.msra.mxu0 0.0
    %404 = vmatprep.subr.mxu0 0.0
    %405 = vmatpush1.xpose.msra.mxu0 0.0
    %406 = vmatprep.subr.mxu0 0.0
    %407 = vmatpush1.xpose.msra.mxu0 0.0
    %408 = vmatprep.subr.mxu0 0.0
    %409 = vmatpush1.xpose.msra.mxu0 0.0
    %410 = vmatprep.subr.mxu0 0.0
    %411 = vmatpush1.xpose.msra.mxu0 0.0
    %412 = vmatprep.subr.mxu0 0.0
    %413 = vmatpush1.xpose.msra.mxu0 0.0
    %414 = vmatprep.subr.mxu0 0.0
    %415 = vmatpush1.xpose.msra.mxu0 0.0
    %416 = vmatprep.subr.mxu0 0.0
    %417 = vmatpush1.xpose.msra.mxu0 0.0
    %418 = vmatprep.subr.mxu0 0.0
    %419 = vmatpush1.xpose.msra.mxu0 0.0
    %420 = vmatprep.subr.mxu0 0.0
    %421 = vmatpush1.xpose.msra.mxu0 0.0
    %422 = vmatprep.subr.mxu0 0.0
    %423 = vmatpush1.xpose.msra.mxu0 0.0
    %424 = vmatprep.subr.mxu0 0.0
    %425 = vmatpush1.xpose.msra.mxu0 0.0
    %426 = vmatprep.subr.mxu0 0.0
    %427 = vmatpush1.xpose.msra.mxu0 0.0
    %428 = vmatprep.subr.mxu0 0.0
    %429 = vmatpush1.xpose.msra.mxu0 0.0
    %430 = vmatprep.subr.mxu0 0.0
    %431 = vmatpush1.xpose.msra.mxu0 0.0
    %432 = vmatprep.subr.mxu0 0.0
    %433 = vmatpush1.xpose.msra.mxu0 0.0
    %434 = vmatprep.subr.mxu0 0.0
    %435 = vmatpush1.xpose.msra.mxu0 0.0
    %436 = vmatprep.subr.mxu0 0.0
    %437 = vmatpush1.xpose.msra.mxu0 0.0
    %438 = vmatprep.subr.mxu0 0.0
    %439 = vmatpush1.xpose.msra.mxu0 0.0
    %440 = vmatprep.subr.mxu0 0.0
    %441 = vmatpush1.xpose.msra.mxu0 0.0
    %442 = vmatprep.subr.mxu0 0.0
    %443 = vmatpush1.xpose.msra.mxu0 0.0
    %444 = vmatprep.subr.mxu0 0.0
    %445 = vmatpush1.xpose.msra.mxu0 0.0
    %446 = vmatprep.subr.mxu0 0.0
    %447 = vmatpush1.xpose.msra.mxu0 0.0
    %448 = vmatprep.subr.mxu0 0.0
    %449 = vmatpush1.xpose.msra.mxu0 0.0
    %450 = vmatprep.subr.mxu0 0.0
    %451 = vmatpush1.xpose.msra.mxu0 0.0
    %452 = vmatprep.mubr.f32.mxu0 0.0
    %453 = vmatmul.mubr.f32.gmra.mrb[0].mxu0 %v384
    %v454 = vpop.f32.mrb[0].mxu0
    %v455 = vadd.f32 0.0, %v454
    %v456 = vpop.f32.mrb[0].mxu0
    %457 = vdwg.mxu0
    %458 = vrot.lane.b32.xlu0 %v228, 96
    %v459 = vpop.permute.xlu0 %458
    %v460 = vsel %vm231, %v228, 0
    %v462 = vsel %vm231, %v459, 0
    %464 = vmatprep.subr.mxu0 0.0
    %465 = vmatpush1.xpose.msra.mxu0 %v462
    %466 = vmatprep.subr.mxu0 0.0
    %467 = vmatpush1.xpose.msra.mxu0 0.0
    %468 = vmatprep.subr.mxu0 0.0
    %469 = vmatpush1.xpose.msra.mxu0 0.0
    %470 = vmatprep.subr.mxu0 0.0
    %471 = vmatpush1.xpose.msra.mxu0 0.0
    %472 = vmatprep.subr.mxu0 0.0
    %473 = vmatpush1.xpose.msra.mxu0 0.0
    %474 = vmatprep.subr.mxu0 0.0
    %475 = vmatpush1.xpose.msra.mxu0 0.0
    %476 = vmatprep.subr.mxu0 0.0
    %477 = vmatpush1.xpose.msra.mxu0 0.0
    %478 = vmatprep.subr.mxu0 0.0
    %479 = vmatpush1.xpose.msra.mxu0 0.0
    %480 = vmatprep.subr.mxu0 0.0
    %481 = vmatpush1.xpose.msra.mxu0 0.0
    %482 = vmatprep.subr.mxu0 0.0
    %483 = vmatpush1.xpose.msra.mxu0 0.0
    %484 = vmatprep.subr.mxu0 0.0
    %485 = vmatpush1.xpose.msra.mxu0 0.0
    %486 = vmatprep.subr.mxu0 0.0
    %487 = vmatpush1.xpose.msra.mxu0 0.0
    %488 = vmatprep.subr.mxu0 0.0
    %489 = vmatpush1.xpose.msra.mxu0 0.0
    %490 = vmatprep.subr.mxu0 0.0
    %491 = vmatpush1.xpose.msra.mxu0 0.0
    %492 = vmatprep.subr.mxu0 0.0
    %493 = vmatpush1.xpose.msra.mxu0 0.0
    %494 = vmatprep.subr.mxu0 0.0
    %495 = vmatpush1.xpose.msra.mxu0 0.0
    %496 = vmatprep.subr.mxu0 0.0
    %497 = vmatpush1.xpose.msra.mxu0 0.0
    %498 = vmatprep.subr.mxu0 0.0
    %499 = vmatpush1.xpose.msra.mxu0 0.0
    %500 = vmatprep.subr.mxu0 0.0
    %501 = vmatpush1.xpose.msra.mxu0 0.0
    %502 = vmatprep.subr.mxu0 0.0
    %503 = vmatpush1.xpose.msra.mxu0 0.0
    %504 = vmatprep.subr.mxu0 0.0
    %505 = vmatpush1.xpose.msra.mxu0 0.0
    %506 = vmatprep.subr.mxu0 0.0
    %507 = vmatpush1.xpose.msra.mxu0 0.0
    %508 = vmatprep.subr.mxu0 0.0
    %509 = vmatpush1.xpose.msra.mxu0 0.0
    %510 = vmatprep.subr.mxu0 0.0
    %511 = vmatpush1.xpose.msra.mxu0 0.0
    %512 = vmatprep.subr.mxu0 0.0
    %513 = vmatpush1.xpose.msra.mxu0 0.0
    %514 = vmatprep.subr.mxu0 0.0
    %515 = vmatpush1.xpose.msra.mxu0 0.0
    %516 = vmatprep.subr.mxu0 0.0
    %517 = vmatpush1.xpose.msra.mxu0 0.0
    %518 = vmatprep.subr.mxu0 0.0
    %519 = vmatpush1.xpose.msra.mxu0 0.0
    %520 = vmatprep.subr.mxu0 0.0
    %521 = vmatpush1.xpose.msra.mxu0 0.0
    %522 = vmatprep.subr.mxu0 0.0
    %523 = vmatpush1.xpose.msra.mxu0 0.0
    %524 = vmatprep.subr.mxu0 0.0
    %525 = vmatpush1.xpose.msra.mxu0 0.0
    %526 = vmatprep.subr.mxu0 0.0
    %527 = vmatpush1.xpose.msra.mxu0 0.0
    %528 = vmatprep.mubr.f32.mxu0 0.0
    %529 = vmatmul.mubr.f32.gmra.mrb[0].mxu0 %v460
    %v530 = vpop.f32.mrb[0].mxu0
    %v531 = vadd.f32 0.0, %v530
    %v532 = vpop.f32.mrb[0].mxu0
    %533 = vdwg.mxu0
    %v534 = vsel %vm231, %v303, -inf
    %535 = vmax.xlane.f32.xlu0 %v534
    %v536 = vpop.xlane.xlu0 %535
    %v537 = vsel %vm231, %v379, -inf
    %538 = vmax.xlane.f32.xlu0 %v537
    %v539 = vpop.xlane.xlu0 %538
    %v540 = vsel %vm231, %v455, -inf
    %541 = vmax.xlane.f32.xlu0 %v540
    %v542 = vpop.xlane.xlu0 %541
    %v543 = vsel %vm231, %v531, -inf
    %544 = vmax.xlane.f32.xlu0 %v543
    %v545 = vpop.xlane.xlu0 %544
    %v546 = vsub.f32 %v303, %v536
    %v547 = vsub.f32 %v379, %v539
    %v548 = vsub.f32 %v455, %v542
    %v549 = vsub.f32 %v531, %v545
    %v550 = vmul.f32 %v546, 1.442695
    %v551 = vpow.pop %v550
    %v552 = vmul.f32 %v547, 1.442695
    %v553 = vpow.pop %v552
    %v554 = vmul.f32 %v548, 1.442695
    %v555 = vpow.pop %v554
    %v556 = vmul.f32 %v549, 1.442695
    %v557 = vpow.pop %v556
    %v558 = vsel %vm231, %v551, 0.0
    %559 = vadd.xlane.f32.xlu0 %v558
    %v560 = vpop.xlane.xlu0 %559
    %v561 = vsel %vm231, %v553, 0.0
    %562 = vadd.xlane.f32.xlu0 %v561
    %v563 = vpop.xlane.xlu0 %562
    %v564 = vsel %vm231, %v555, 0.0
    %565 = vadd.xlane.f32.xlu0 %v564
    %v566 = vpop.xlane.xlu0 %565
    %v567 = vsel %vm231, %v557, 0.0
    %568 = vadd.xlane.f32.xlu0 %v567
    %v569 = vpop.xlane.xlu0 %568
    %v570 = vrcp.pop %v560
    %v571 = vrcp.pop %v563
    %v572 = vrcp.pop %v566
    %v573 = vrcp.pop %v569
    %v574 = vmul.f32 %v551, %v570
    %v575 = vmul.f32 %v553, %v571
    %v576 = vmul.f32 %v555, %v572
    %v577 = vmul.f32 %v557, %v573
    %578 = vrot.lane.b32.xlu0 %v219, 64
    %v579 = vpop.permute.xlu0 %578
    %v582 = vsel %vm231, %v574, 0
    %584 = vmatprep.subr.mxu0 0.0
    %585 = vmatpush1.msra.mxu0 %v579
    %586 = vmatprep.subr.mxu0 0.0
    %587 = vmatpush1.msra.mxu0 0.0
    %588 = vmatprep.subr.mxu0 0.0
    %589 = vmatpush1.msra.mxu0 0.0
    %590 = vmatprep.subr.mxu0 0.0
    %591 = vmatpush1.msra.mxu0 0.0
    %592 = vmatprep.subr.mxu0 0.0
    %593 = vmatpush1.msra.mxu0 0.0
    %594 = vmatprep.subr.mxu0 0.0
    %595 = vmatpush1.msra.mxu0 0.0
    %596 = vmatprep.subr.mxu0 0.0
    %597 = vmatpush1.msra.mxu0 0.0
    %598 = vmatprep.subr.mxu0 0.0
    %599 = vmatpush1.msra.mxu0 0.0
    %600 = vmatprep.subr.mxu0 0.0
    %601 = vmatpush1.msra.mxu0 0.0
    %602 = vmatprep.subr.mxu0 0.0
    %603 = vmatpush1.msra.mxu0 0.0
    %604 = vmatprep.subr.mxu0 0.0
    %605 = vmatpush1.msra.mxu0 0.0
    %606 = vmatprep.subr.mxu0 0.0
    %607 = vmatpush1.msra.mxu0 0.0
    %608 = vmatprep.subr.mxu0 0.0
    %609 = vmatpush1.msra.mxu0 0.0
    %610 = vmatprep.subr.mxu0 0.0
    %611 = vmatpush1.msra.mxu0 0.0
    %612 = vmatprep.subr.mxu0 0.0
    %613 = vmatpush1.msra.mxu0 0.0
    %614 = vmatprep.subr.mxu0 0.0
    %615 = vmatpush1.msra.mxu0 0.0
    %616 = vmatprep.subr.mxu0 0.0
    %617 = vmatpush1.msra.mxu0 0.0
    %618 = vmatprep.subr.mxu0 0.0
    %619 = vmatpush1.msra.mxu0 0.0
    %620 = vmatprep.subr.mxu0 0.0
    %621 = vmatpush1.msra.mxu0 0.0
    %622 = vmatprep.subr.mxu0 0.0
    %623 = vmatpush1.msra.mxu0 0.0
    %624 = vmatprep.subr.mxu0 0.0
    %625 = vmatpush1.msra.mxu0 0.0
    %626 = vmatprep.subr.mxu0 0.0
    %627 = vmatpush1.msra.mxu0 0.0
    %628 = vmatprep.subr.mxu0 0.0
    %629 = vmatpush1.msra.mxu0 0.0
    %630 = vmatprep.subr.mxu0 0.0
    %631 = vmatpush1.msra.mxu0 0.0
    %632 = vmatprep.subr.mxu0 0.0
    %633 = vmatpush1.msra.mxu0 0.0
    %634 = vmatprep.subr.mxu0 0.0
    %635 = vmatpush1.msra.mxu0 0.0
    %636 = vmatprep.subr.mxu0 0.0
    %637 = vmatpush1.msra.mxu0 0.0
    %638 = vmatprep.subr.mxu0 0.0
    %639 = vmatpush1.msra.mxu0 0.0
    %640 = vmatprep.subr.mxu0 0.0
    %641 = vmatpush1.msra.mxu0 0.0
    %642 = vmatprep.subr.mxu0 0.0
    %643 = vmatpush1.msra.mxu0 0.0
    %644 = vmatprep.subr.mxu0 0.0
    %645 = vmatpush1.msra.mxu0 0.0
    %646 = vmatprep.subr.mxu0 0.0
    %647 = vmatpush1.msra.mxu0 0.0
    %648 = vmatprep.mubr.f32.mxu0 0.0
    %649 = vmatmul.mubr.f32.gmra.mrb[0].mxu0 %v582
    %v650 = vpop.f32.mrb[0].mxu0
    %v651 = vadd.f32 0.0, %v650
    %v652 = vpop.f32.mrb[0].mxu0
    %653 = vdwg.mxu0
    %654 = vrot.lane.b32.xlu0 %v224, 64
    %v655 = vpop.permute.xlu0 %654
    %v658 = vsel %vm231, %v575, 0
    %660 = vmatprep.subr.mxu0 0.0
    %661 = vmatpush1.msra.mxu0 %v655
    %662 = vmatprep.subr.mxu0 0.0
    %663 = vmatpush1.msra.mxu0 0.0
    %664 = vmatprep.subr.mxu0 0.0
    %665 = vmatpush1.msra.mxu0 0.0
    %666 = vmatprep.subr.mxu0 0.0
    %667 = vmatpush1.msra.mxu0 0.0
    %668 = vmatprep.subr.mxu0 0.0
    %669 = vmatpush1.msra.mxu0 0.0
    %670 = vmatprep.subr.mxu0 0.0
    %671 = vmatpush1.msra.mxu0 0.0
    %672 = vmatprep.subr.mxu0 0.0
    %673 = vmatpush1.msra.mxu0 0.0
    %674 = vmatprep.subr.mxu0 0.0
    %675 = vmatpush1.msra.mxu0 0.0
    %676 = vmatprep.subr.mxu0 0.0
    %677 = vmatpush1.msra.mxu0 0.0
    %678 = vmatprep.subr.mxu0 0.0
    %679 = vmatpush1.msra.mxu0 0.0
    %680 = vmatprep.subr.mxu0 0.0
    %681 = vmatpush1.msra.mxu0 0.0
    %682 = vmatprep.subr.mxu0 0.0
    %683 = vmatpush1.msra.mxu0 0.0
    %684 = vmatprep.subr.mxu0 0.0
    %685 = vmatpush1.msra.mxu0 0.0
    %686 = vmatprep.subr.mxu0 0.0
    %687 = vmatpush1.msra.mxu0 0.0
    %688 = vmatprep.subr.mxu0 0.0
    %689 = vmatpush1.msra.mxu0 0.0
    %690 = vmatprep.subr.mxu0 0.0
    %691 = vmatpush1.msra.mxu0 0.0
    %692 = vmatprep.subr.mxu0 0.0
    %693 = vmatpush1.msra.mxu0 0.0
    %694 = vmatprep.subr.mxu0 0.0
    %695 = vmatpush1.msra.mxu0 0.0
    %696 = vmatprep.subr.mxu0 0.0
    %697 = vmatpush1.msra.mxu0 0.0
    %698 = vmatprep.subr.mxu0 0.0
    %699 = vmatpush1.msra.mxu0 0.0
    %700 = vmatprep.subr.mxu0 0.0
    %701 = vmatpush1.msra.mxu0 0.0
    %702 = vmatprep.subr.mxu0 0.0
    %703 = vmatpush1.msra.mxu0 0.0
    %704 = vmatprep.subr.mxu0 0.0
    %705 = vmatpush1.msra.mxu0 0.0
    %706 = vmatprep.subr.mxu0 0.0
    %707 = vmatpush1.msra.mxu0 0.0
    %708 = vmatprep.subr.mxu0 0.0
    %709 = vmatpush1.msra.mxu0 0.0
    %710 = vmatprep.subr.mxu0 0.0
    %711 = vmatpush1.msra.mxu0 0.0
    %712 = vmatprep.subr.mxu0 0.0
    %713 = vmatpush1.msra.mxu0 0.0
    %714 = vmatprep.subr.mxu0 0.0
    %715 = vmatpush1.msra.mxu0 0.0
    %716 = vmatprep.subr.mxu0 0.0
    %717 = vmatpush1.msra.mxu0 0.0
    %718 = vmatprep.subr.mxu0 0.0
    %719 = vmatpush1.msra.mxu0 0.0
    %720 = vmatprep.subr.mxu0 0.0
    %721 = vmatpush1.msra.mxu0 0.0
    %722 = vmatprep.subr.mxu0 0.0
    %723 = vmatpush1.msra.mxu0 0.0
    %724 = vmatprep.mubr.f32.mxu0 0.0
    %725 = vmatmul.mubr.f32.gmra.mrb[0].mxu0 %v658
    %v726 = vpop.f32.mrb[0].mxu0
    %v727 = vadd.f32 0.0, %v726
    %v728 = vpop.f32.mrb[0].mxu0
    %729 = vdwg.mxu0
    %730 = vrot.lane.b32.xlu0 %v226, 64
    %v731 = vpop.permute.xlu0 %730
    %v734 = vsel %vm231, %v576, 0
    %736 = vmatprep.subr.mxu0 0.0
    %737 = vmatpush1.msra.mxu0 %v731
    %738 = vmatprep.subr.mxu0 0.0
    %739 = vmatpush1.msra.mxu0 0.0
    %740 = vmatprep.subr.mxu0 0.0
    %741 = vmatpush1.msra.mxu0 0.0
    %742 = vmatprep.subr.mxu0 0.0
    %743 = vmatpush1.msra.mxu0 0.0
    %744 = vmatprep.subr.mxu0 0.0
    %745 = vmatpush1.msra.mxu0 0.0
    %746 = vmatprep.subr.mxu0 0.0
    %747 = vmatpush1.msra.mxu0 0.0
    %748 = vmatprep.subr.mxu0 0.0
    %749 = vmatpush1.msra.mxu0 0.0
    %750 = vmatprep.subr.mxu0 0.0
    %751 = vmatpush1.msra.mxu0 0.0
    %752 = vmatprep.subr.mxu0 0.0
    %753 = vmatpush1.msra.mxu0 0.0
    %754 = vmatprep.subr.mxu0 0.0
    %755 = vmatpush1.msra.mxu0 0.0
    %756 = vmatprep.subr.mxu0 0.0
    %757 = vmatpush1.msra.mxu0 0.0
    %758 = vmatprep.subr.mxu0 0.0
    %759 = vmatpush1.msra.mxu0 0.0
    %760 = vmatprep.subr.mxu0 0.0
    %761 = vmatpush1.msra.mxu0 0.0
    %762 = vmatprep.subr.mxu0 0.0
    %763 = vmatpush1.msra.mxu0 0.0
    %764 = vmatprep.subr.mxu0 0.0
    %765 = vmatpush1.msra.mxu0 0.0
    %766 = vmatprep.subr.mxu0 0.0
    %767 = vmatpush1.msra.mxu0 0.0
    %768 = vmatprep.subr.mxu0 0.0
    %769 = vmatpush1.msra.mxu0 0.0
    %770 = vmatprep.subr.mxu0 0.0
    %771 = vmatpush1.msra.mxu0 0.0
    %772 = vmatprep.subr.mxu0 0.0
    %773 = vmatpush1.msra.mxu0 0.0
    %774 = vmatprep.subr.mxu0 0.0
    %775 = vmatpush1.msra.mxu0 0.0
    %776 = vmatprep.subr.mxu0 0.0
    %777 = vmatpush1.msra.mxu0 0.0
    %778 = vmatprep.subr.mxu0 0.0
    %779 = vmatpush1.msra.mxu0 0.0
    %780 = vmatprep.subr.mxu0 0.0
    %781 = vmatpush1.msra.mxu0 0.0
    %782 = vmatprep.subr.mxu0 0.0
    %783 = vmatpush1.msra.mxu0 0.0
    %784 = vmatprep.subr.mxu0 0.0
    %785 = vmatpush1.msra.mxu0 0.0
    %786 = vmatprep.subr.mxu0 0.0
    %787 = vmatpush1.msra.mxu0 0.0
    %788 = vmatprep.subr.mxu0 0.0
    %789 = vmatpush1.msra.mxu0 0.0
    %790 = vmatprep.subr.mxu0 0.0
    %791 = vmatpush1.msra.mxu0 0.0
    %792 = vmatprep.subr.mxu0 0.0
    %793 = vmatpush1.msra.mxu0 0.0
    %794 = vmatprep.subr.mxu0 0.0
    %795 = vmatpush1.msra.mxu0 0.0
    %796 = vmatprep.subr.mxu0 0.0
    %797 = vmatpush1.msra.mxu0 0.0
    %798 = vmatprep.subr.mxu0 0.0
    %799 = vmatpush1.msra.mxu0 0.0
    %800 = vmatprep.mubr.f32.mxu0 0.0
    %801 = vmatmul.mubr.f32.gmra.mrb[0].mxu0 %v734
    %v802 = vpop.f32.mrb[0].mxu0
    %v803 = vadd.f32 0.0, %v802
    %v804 = vpop.f32.mrb[0].mxu0
    %805 = vdwg.mxu0
    %806 = vrot.lane.b32.xlu0 %v228, 64
    %v807 = vpop.permute.xlu0 %806
    %v810 = vsel %vm231, %v577, 0
    %812 = vmatprep.subr.mxu0 0.0
    %813 = vmatpush1.msra.mxu0 %v807
    %814 = vmatprep.subr.mxu0 0.0
    %815 = vmatpush1.msra.mxu0 0.0
    %816 = vmatprep.subr.mxu0 0.0
    %817 = vmatpush1.msra.mxu0 0.0
    %818 = vmatprep.subr.mxu0 0.0
    %819 = vmatpush1.msra.mxu0 0.0
    %820 = vmatprep.subr.mxu0 0.0
    %821 = vmatpush1.msra.mxu0 0.0
    %822 = vmatprep.subr.mxu0 0.0
    %823 = vmatpush1.msra.mxu0 0.0
    %824 = vmatprep.subr.mxu0 0.0
    %825 = vmatpush1.msra.mxu0 0.0
    %826 = vmatprep.subr.mxu0 0.0
    %827 = vmatpush1.msra.mxu0 0.0
    %828 = vmatprep.subr.mxu0 0.0
    %829 = vmatpush1.msra.mxu0 0.0
    %830 = vmatprep.subr.mxu0 0.0
    %831 = vmatpush1.msra.mxu0 0.0
    %832 = vmatprep.subr.mxu0 0.0
    %833 = vmatpush1.msra.mxu0 0.0
    %834 = vmatprep.subr.mxu0 0.0
    %835 = vmatpush1.msra.mxu0 0.0
    %836 = vmatprep.subr.mxu0 0.0
    %837 = vmatpush1.msra.mxu0 0.0
    %838 = vmatprep.subr.mxu0 0.0
    %839 = vmatpush1.msra.mxu0 0.0
    %840 = vmatprep.subr.mxu0 0.0
    %841 = vmatpush1.msra.mxu0 0.0
    %842 = vmatprep.subr.mxu0 0.0
    %843 = vmatpush1.msra.mxu0 0.0
    %844 = vmatprep.subr.mxu0 0.0
    %845 = vmatpush1.msra.mxu0 0.0
    %846 = vmatprep.subr.mxu0 0.0
    %847 = vmatpush1.msra.mxu0 0.0
    %848 = vmatprep.subr.mxu0 0.0
    %849 = vmatpush1.msra.mxu0 0.0
    %850 = vmatprep.subr.mxu0 0.0
    %851 = vmatpush1.msra.mxu0 0.0
    %852 = vmatprep.subr.mxu0 0.0
    %853 = vmatpush1.msra.mxu0 0.0
    %854 = vmatprep.subr.mxu0 0.0
    %855 = vmatpush1.msra.mxu0 0.0
    %856 = vmatprep.subr.mxu0 0.0
    %857 = vmatpush1.msra.mxu0 0.0
    %858 = vmatprep.subr.mxu0 0.0
    %859 = vmatpush1.msra.mxu0 0.0
    %860 = vmatprep.subr.mxu0 0.0
    %861 = vmatpush1.msra.mxu0 0.0
    %862 = vmatprep.subr.mxu0 0.0
    %863 = vmatpush1.msra.mxu0 0.0
    %864 = vmatprep.subr.mxu0 0.0
    %865 = vmatpush1.msra.mxu0 0.0
    %866 = vmatprep.subr.mxu0 0.0
    %867 = vmatpush1.msra.mxu0 0.0
    %868 = vmatprep.subr.mxu0 0.0
    %869 = vmatpush1.msra.mxu0 0.0
    %870 = vmatprep.subr.mxu0 0.0
    %871 = vmatpush1.msra.mxu0 0.0
    %872 = vmatprep.subr.mxu0 0.0
    %873 = vmatpush1.msra.mxu0 0.0
    %874 = vmatprep.subr.mxu0 0.0
    %875 = vmatpush1.msra.mxu0 0.0
    %876 = vmatprep.mubr.f32.mxu0 0.0
    %877 = vmatmul.mubr.f32.gmra.mrb[0].mxu0 %v810
    %v878 = vpop.f32.mrb[0].mxu0
    %v879 = vadd.f32 0.0, %v878
    %v880 = vpop.f32.mrb[0].mxu0
    %881 = vdwg.mxu0
    %883 = vrot.lane.b32.xlu0 %v727, 8
    %v884 = vpop.permute.xlu0 %883
    %887 = vrot.lane.b32.xlu0 %v803, 16
    %v888 = vpop.permute.xlu0 %887
    %891 = vrot.lane.b32.xlu0 %v879, 24
    %v892 = vpop.permute.xlu0 %891
    %v894 = vsel %vm231, %v651, %v884
    %vm895 = vcmask 130048
    %v896 = vsel %vm895, %v894, %v888
    %vm897 = vcmask 195584
    %v898 = vsel %vm897, %v896, %v892
    %v899 = vld [vmem:[%s3] sm:$0xff]
    %v900 = vld [vmem:[%s3 + $0x8] sm:$0xff]
    %v901 = vld [vmem:[%s3 + $0x10] sm:$0xff]
    %v902 = vld [vmem:[%s3 + $0x18] sm:$0xff]
    %v903 = vlaneseq
    %v904 = vshrl.u32 %v903, 7
    %v905 = vsub.s32 0, %v904
    %v906 = vrot.slane %v143, %v905
    %v908 = vsel %vm148, %v898, 0
    %910 = vmatprep.subr.mxu0 0.0
    %911 = vmatpush1.msra.mxu0 %v899
    %912 = vmatprep.subr.mxu0 0.0
    %913 = vmatpush1.msra.mxu0 %v900
    %914 = vmatprep.subr.mxu0 0.0
    %915 = vmatpush1.msra.mxu0 %v901
    %916 = vmatprep.subr.mxu0 0.0
    %917 = vmatpush1.msra.mxu0 %v902
    %918 = vmatprep.subr.mxu0 0.0
    %919 = vmatpush1.msra.mxu0 0.0
    %920 = vmatprep.subr.mxu0 0.0
    %921 = vmatpush1.msra.mxu0 0.0
    %922 = vmatprep.subr.mxu0 0.0
    %923 = vmatpush1.msra.mxu0 0.0
    %924 = vmatprep.subr.mxu0 0.0
    %925 = vmatpush1.msra.mxu0 0.0
    %926 = vmatprep.subr.mxu0 0.0
    %927 = vmatpush1.msra.mxu0 0.0
    %928 = vmatprep.subr.mxu0 0.0
    %929 = vmatpush1.msra.mxu0 0.0
    %930 = vmatprep.subr.mxu0 0.0
    %931 = vmatpush1.msra.mxu0 0.0
    %932 = vmatprep.subr.mxu0 0.0
    %933 = vmatpush1.msra.mxu0 0.0
    %934 = vmatprep.subr.mxu0 0.0
    %935 = vmatpush1.msra.mxu0 0.0
    %936 = vmatprep.subr.mxu0 0.0
    %937 = vmatpush1.msra.mxu0 0.0
    %938 = vmatprep.subr.mxu0 0.0
    %939 = vmatpush1.msra.mxu0 0.0
    %940 = vmatprep.subr.mxu0 0.0
    %941 = vmatpush1.msra.mxu0 0.0
    %942 = vmatprep.subr.mxu0 0.0
    %943 = vmatpush1.msra.mxu0 0.0
    %944 = vmatprep.subr.mxu0 0.0
    %945 = vmatpush1.msra.mxu0 0.0
    %946 = vmatprep.subr.mxu0 0.0
    %947 = vmatpush1.msra.mxu0 0.0
    %948 = vmatprep.subr.mxu0 0.0
    %949 = vmatpush1.msra.mxu0 0.0
    %950 = vmatprep.subr.mxu0 0.0
    %951 = vmatpush1.msra.mxu0 0.0
    %952 = vmatprep.subr.mxu0 0.0
    %953 = vmatpush1.msra.mxu0 0.0
    %954 = vmatprep.subr.mxu0 0.0
    %955 = vmatpush1.msra.mxu0 0.0
    %956 = vmatprep.subr.mxu0 0.0
    %957 = vmatpush1.msra.mxu0 0.0
    %958 = vmatprep.subr.mxu0 0.0
    %959 = vmatpush1.msra.mxu0 0.0
    %960 = vmatprep.subr.mxu0 0.0
    %961 = vmatpush1.msra.mxu0 0.0
    %962 = vmatprep.subr.mxu0 0.0
    %963 = vmatpush1.msra.mxu0 0.0
    %964 = vmatprep.subr.mxu0 0.0
    %965 = vmatpush1.msra.mxu0 0.0
    %966 = vmatprep.subr.mxu0 0.0
    %967 = vmatpush1.msra.mxu0 0.0
    %968 = vmatprep.subr.mxu0 0.0
    %969 = vmatpush1.msra.mxu0 0.0
    %970 = vmatprep.subr.mxu0 0.0
    %971 = vmatpush1.msra.mxu0 0.0
    %972 = vmatprep.subr.mxu0 0.0
    %973 = vmatpush1.msra.mxu0 0.0
    %974 = vmatprep.mubr.f32.mxu0 0.0
    %975 = vmatmul.mubr.f32.gmra.mrb[0].mxu0 %v908
    %v976 = vpop.f32.mrb[0].mxu0
    %v977 = vadd.f32 %v906, %v976
    %v978 = vpop.f32.mrb[0].mxu0
    %979 = vdwg.mxu0
    %v980 = vadd.f32 %v142, %v977
    %v981 = vsel %vm148, %v980, 0.0
    %982 = vadd.xlane.f32.xlu0 %v981
    %v983 = vpop.xlane.xlu0 %982
    %v984 = vrcp.pop 32.0
    %v985 = vmul.f32 %v983, %v984
    %v986 = vsub.f32 %v980, %v985
    %v987 = vmul.f32 %v986, %v986
    %v988 = vsel %vm148, %v987, 0.0
    %989 = vadd.xlane.f32.xlu0 %v988
    %v990 = vpop.xlane.xlu0 %989
    %v991 = vmul.f32 %v990, %v984
    %v992 = vadd.f32 %v991, 1e-06
    %v993 = vrsqrt.pop %v992
    %v994 = vmul.f32 %v986, %v993
    %v995 = vlaneseq
    %v996 = vshrl.u32 %v995, 7
    %v997 = vsub.s32 1, %v996
    %v998 = vrot.slane %v143, %v997
    %v999 = vmul.f32 %v994, %v998
    %v1000 = vlaneseq
    %v1001 = vshrl.u32 %v1000, 7
    %v1002 = vsub.s32 2, %v1001
    %v1003 = vrot.slane %v143, %v1002
    %v1004 = vadd.f32 %v999, %v1003
    %v1005 = vld [vmem:[%s5] sm:$0xff]
    %v1006 = vld [vmem:[%s5 + $0x8] sm:$0xff]
    %v1007 = vld [vmem:[%s5 + $0x10] sm:$0xff]
    %v1008 = vld [vmem:[%s5 + $0x18] sm:$0xff]
    %v1009 = vld [vmem:[%s6] sm:$0x1]
    %v1011 = vlaneseq
    %v1012 = vshrl.u32 %v1011, 7
    %v1013 = vsub.s32 0, %v1012
    %v1014 = vrot.slane %v1009, %v1013
    %v1017 = vsel %vm148, %v1004, 0
    %1019 = vmatprep.subr.mxu0 0.0
    %1020 = vmatpush1.msra.mxu0 %v1005
    %1021 = vmatprep.subr.mxu0 0.0
    %1022 = vmatpush1.msra.mxu0 %v1006
    %1023 = vmatprep.subr.mxu0 0.0
    %1024 = vmatpush1.msra.mxu0 %v1007
    %1025 = vmatprep.subr.mxu0 0.0
    %1026 = vmatpush1.msra.mxu0 %v1008
    %1027 = vmatprep.subr.mxu0 0.0
    %1028 = vmatpush1.msra.mxu0 0.0
    %1029 = vmatprep.subr.mxu0 0.0
    %1030 = vmatpush1.msra.mxu0 0.0
    %1031 = vmatprep.subr.mxu0 0.0
    %1032 = vmatpush1.msra.mxu0 0.0
    %1033 = vmatprep.subr.mxu0 0.0
    %1034 = vmatpush1.msra.mxu0 0.0
    %1035 = vmatprep.subr.mxu0 0.0
    %1036 = vmatpush1.msra.mxu0 0.0
    %1037 = vmatprep.subr.mxu0 0.0
    %1038 = vmatpush1.msra.mxu0 0.0
    %1039 = vmatprep.subr.mxu0 0.0
    %1040 = vmatpush1.msra.mxu0 0.0
    %1041 = vmatprep.subr.mxu0 0.0
    %1042 = vmatpush1.msra.mxu0 0.0
    %1043 = vmatprep.subr.mxu0 0.0
    %1044 = vmatpush1.msra.mxu0 0.0
    %1045 = vmatprep.subr.mxu0 0.0
    %1046 = vmatpush1.msra.mxu0 0.0
    %1047 = vmatprep.subr.mxu0 0.0
    %1048 = vmatpush1.msra.mxu0 0.0
    %1049 = vmatprep.subr.mxu0 0.0
    %1050 = vmatpush1.msra.mxu0 0.0
    %1051 = vmatprep.subr.mxu0 0.0
    %1052 = vmatpush1.msra.mxu0 0.0
    %1053 = vmatprep.subr.mxu0 0.0
    %1054 = vmatpush1.msra.mxu0 0.0
    %1055 = vmatprep.subr.mxu0 0.0
    %1056 = vmatpush1.msra.mxu0 0.0
    %1057 = vmatprep.subr.mxu0 0.0
    %1058 = vmatpush1.msra.mxu0 0.0
    %1059 = vmatprep.subr.mxu0 0.0
    %1060 = vmatpush1.msra.mxu0 0.0
    %1061 = vmatprep.subr.mxu0 0.0
    %1062 = vmatpush1.msra.mxu0 0.0
    %1063 = vmatprep.subr.mxu0 0.0
    %1064 = vmatpush1.msra.mxu0 0.0
    %1065 = vmatprep.subr.mxu0 0.0
    %1066 = vmatpush1.msra.mxu0 0.0
    %1067 = vmatprep.subr.mxu0 0.0
    %1068 = vmatpush1.msra.mxu0 0.0
    %1069 = vmatprep.subr.mxu0 0.0
    %1070 = vmatpush1.msra.mxu0 0.0
    %1071 = vmatprep.subr.mxu0 0.0
    %1072 = vmatpush1.msra.mxu0 0.0
    %1073 = vmatprep.subr.mxu0 0.0
    %1074 = vmatpush1.msra.mxu0 0.0
    %1075 = vmatprep.subr.mxu0 0.0
    %1076 = vmatpush1.msra.mxu0 0.0
    %1077 = vmatprep.subr.mxu0 0.0
    %1078 = vmatpush1.msra.mxu0 0.0
    %1079 = vmatprep.subr.mxu0 0.0
    %1080 = vmatpush1.msra.mxu0 0.0
    %1081 = vmatprep.subr.mxu0 0.0
    %1082 = vmatpush1.msra.mxu0 0.0
    %1083 = vmatprep.mubr.f32.mxu0 0.0
    %1084 = vmatmul.mubr.f32.gmra.mrb[0].mxu0 %v1017
    %v1085 = vpop.f32.mrb[0].mxu0
    %v1086 = vadd.f32 %v1014, %v1085
    %v1087 = vpop.f32.mrb[0].mxu0
    %1088 = vdwg.mxu0
    %v1089 = vmax.f32 %v1086, 0.0
    %v1090 = vld [vmem:[%s7] sm:$0xff]
    %v1091 = vld [vmem:[%s7 + $0x8] sm:$0xff]
    %v1092 = vld [vmem:[%s7 + $0x10] sm:$0xff]
    %v1093 = vld [vmem:[%s7 + $0x18] sm:$0xff]
    %v1094 = vld [vmem:[%s7 + $0x20] sm:$0xff]
    %v1095 = vld [vmem:[%s7 + $0x28] sm:$0xff]
    %v1096 = vld [vmem:[%s7 + $0x30] sm:$0xff]
    %v1097 = vld [vmem:[%s7 + $0x38] sm:$0xff]
    %v1098 = vlaneseq
    %v1099 = vshrl.u32 %v1098, 7
    %v1100 = vsub.s32 3, %v1099
    %v1101 = vrot.slane %v143, %v1100
    %vm1102 = vcmask 523264
    %v1104 = vsel %vm1102, %v1089, 0
    %1106 = vmatprep.subr.mxu0 0.0
    %1107 = vmatpush1.msra.mxu0 %v1090
    %1108 = vmatprep.subr.mxu0 0.0
    %1109 = vmatpush1.msra.mxu0 %v1091
    %1110 = vmatprep.subr.mxu0 0.0
    %1111 = vmatpush1.msra.mxu0 %v1092
    %1112 = vmatprep.subr.mxu0 0.0
    %1113 = vmatpush1.msra.mxu0 %v1093
    %1114 = vmatprep.subr.mxu0 0.0
    %1115 = vmatpush1.msra.mxu0 %v1094
    %1116 = vmatprep.subr.mxu0 0.0
    %1117 = vmatpush1.msra.mxu0 %v1095
    %1118 = vmatprep.subr.mxu0 0.0
    %1119 = vmatpush1.msra.mxu0 %v1096
    %1120 = vmatprep.subr.mxu0 0.0
    %1121 = vmatpush1.msra.mxu0 %v1097
    %1122 = vmatprep.subr.mxu0 0.0
    %1123 = vmatpush1.msra.mxu0 0.0
    %1124 = vmatprep.subr.mxu0 0.0
    %1125 = vmatpush1.msra.mxu0 0.0
    %1126 = vmatprep.subr.mxu0 0.0
    %1127 = vmatpush1.msra.mxu0 0.0
    %1128 = vmatprep.subr.mxu0 0.0
    %1129 = vmatpush1.msra.mxu0 0.0
    %1130 = vmatprep.subr.mxu0 0.0
    %1131 = vmatpush1.msra.mxu0 0.0
    %1132 = vmatprep.subr.mxu0 0.0
    %1133 = vmatpush1.msra.mxu0 0.0
    %1134 = vmatprep.subr.mxu0 0.0
    %1135 = vmatpush1.msra.mxu0 0.0
    %1136 = vmatprep.subr.mxu0 0.0
    %1137 = vmatpush1.msra.mxu0 0.0
    %1138 = vmatprep.subr.mxu0 0.0
    %1139 = vmatpush1.msra.mxu0 0.0
    %1140 = vmatprep.subr.mxu0 0.0
    %1141 = vmatpush1.msra.mxu0 0.0
    %1142 = vmatprep.subr.mxu0 0.0
    %1143 = vmatpush1.msra.mxu0 0.0
    %1144 = vmatprep.subr.mxu0 0.0
    %1145 = vmatpush1.msra.mxu0 0.0
    %1146 = vmatprep.subr.mxu0 0.0
    %1147 = vmatpush1.msra.mxu0 0.0
    %1148 = vmatprep.subr.mxu0 0.0
    %1149 = vmatpush1.msra.mxu0 0.0
    %1150 = vmatprep.subr.mxu0 0.0
    %1151 = vmatpush1.msra.mxu0 0.0
    %1152 = vmatprep.subr.mxu0 0.0
    %1153 = vmatpush1.msra.mxu0 0.0
    %1154 = vmatprep.subr.mxu0 0.0
    %1155 = vmatpush1.msra.mxu0 0.0
    %1156 = vmatprep.subr.mxu0 0.0
    %1157 = vmatpush1.msra.mxu0 0.0
    %1158 = vmatprep.subr.mxu0 0.0
    %1159 = vmatpush1.msra.mxu0 0.0
    %1160 = vmatprep.subr.mxu0 0.0
    %1161 = vmatpush1.msra.mxu0 0.0
    %1162 = vmatprep.subr.mxu0 0.0
    %1163 = vmatpush1.msra.mxu0 0.0
    %1164 = vmatprep.subr.mxu0 0.0
    %1165 = vmatpush1.msra.mxu0 0.0
    %1166 = vmatprep.subr.mxu0 0.0
    %1167 = vmatpush1.msra.mxu0 0.0
    %1168 = vmatprep.subr.mxu0 0.0
    %1169 = vmatpush1.msra.mxu0 0.0
    %1170 = vmatprep.mubr.f32.mxu0 0.0
    %1171 = vmatmul.mubr.f32.gmra.mrb[0].mxu0 %v1104
    %v1172 = vpop.f32.mrb[0].mxu0
    %v1173 = vadd.f32 %v1101, %v1172
    %v1174 = vpop.f32.mrb[0].mxu0
    %1175 = vdwg.mxu0
    %v1176 = vadd.f32 %v1004, %v1173
    %v1177 = vsel %vm148, %v1176, 0.0
    %1178 = vadd.xlane.f32.xlu0 %v1177
    %v1179 = vpop.xlane.xlu0 %1178
    %v1180 = vmul.f32 %v1179, %v984
    %v1181 = vsub.f32 %v1176, %v1180
    %v1182 = vmul.f32 %v1181, %v1181
    %v1183 = vsel %vm148, %v1182, 0.0
    %1184 = vadd.xlane.f32.xlu0 %v1183
    %v1185 = vpop.xlane.xlu0 %1184
    %v1186 = vmul.f32 %v1185, %v984
    %v1187 = vadd.f32 %v1186, 1e-06
    %v1188 = vrsqrt.pop %v1187
    %v1189 = vmul.f32 %v1181, %v1188
    %v1190 = vlaneseq
    %v1191 = vshrl.u32 %v1190, 7
    %v1192 = vsub.s32 4, %v1191
    %v1193 = vrot.slane %v143, %v1192
    %v1194 = vmul.f32 %v1189, %v1193
    %v1195 = vlaneseq
    %v1196 = vshrl.u32 %v1195, 7
    %v1197 = vsub.s32 5, %v1196
    %v1198 = vrot.slane %v143, %v1197
    %v1199 = vadd.f32 %v1194, %v1198
    %s1200 = scalar_lea.vmem [#allocation5], 8
    %v1201 = vld [vmem:[%s1200] sm:$0xff]
    %s1202 = scalar_lea.vmem %s2, 32
    %v1203 = vld [vmem:[%s1202] sm:$0xff]
    %v1204 = vld [vmem:[%s1202 + $0x8] sm:$0xff]
    %v1205 = vld [vmem:[%s1202 + $0x10] sm:$0xff]
    %v1206 = vld [vmem:[%s1202 + $0x18] sm:$0xff]
    %v1208 = vsel %vm148, %v1199, 0
    %1210 = vmatprep.subr.mxu0 0.0
    %1211 = vmatpush1.msra.mxu0 %v1203
    %1212 = vmatprep.subr.mxu0 0.0
    %1213 = vmatpush1.msra.mxu0 %v1204
    %1214 = vmatprep.subr.mxu0 0.0
    %1215 = vmatpush1.msra.mxu0 %v1205
    %1216 = vmatprep.subr.mxu0 0.0
    %1217 = vmatpush1.msra.mxu0 %v1206
    %1218 = vmatprep.subr.mxu0 0.0
    %1219 = vmatpush1.msra.mxu0 0.0
    %1220 = vmatprep.subr.mxu0 0.0
    %1221 = vmatpush1.msra.mxu0 0.0
    %1222 = vmatprep.subr.mxu0 0.0
    %1223 = vmatpush1.msra.mxu0 0.0
    %1224 = vmatprep.subr.mxu0 0.0
    %1225 = vmatpush1.msra.mxu0 0.0
    %1226 = vmatprep.subr.mxu0 0.0
    %1227 = vmatpush1.msra.mxu0 0.0
    %1228 = vmatprep.subr.mxu0 0.0
    %1229 = vmatpush1.msra.mxu0 0.0
    %1230 = vmatprep.subr.mxu0 0.0
    %1231 = vmatpush1.msra.mxu0 0.0
    %1232 = vmatprep.subr.mxu0 0.0
    %1233 = vmatpush1.msra.mxu0 0.0
    %1234 = vmatprep.subr.mxu0 0.0
    %1235 = vmatpush1.msra.mxu0 0.0
    %1236 = vmatprep.subr.mxu0 0.0
    %1237 = vmatpush1.msra.mxu0 0.0
    %1238 = vmatprep.subr.mxu0 0.0
    %1239 = vmatpush1.msra.mxu0 0.0
    %1240 = vmatprep.subr.mxu0 0.0
    %1241 = vmatpush1.msra.mxu0 0.0
    %1242 = vmatprep.subr.mxu0 0.0
    %1243 = vmatpush1.msra.mxu0 0.0
    %1244 = vmatprep.subr.mxu0 0.0
    %1245 = vmatpush1.msra.mxu0 0.0
    %1246 = vmatprep.subr.mxu0 0.0
    %1247 = vmatpush1.msra.mxu0 0.0
    %1248 = vmatprep.subr.mxu0 0.0
    %1249 = vmatpush1.msra.mxu0 0.0
    %1250 = vmatprep.subr.mxu0 0.0
    %1251 = vmatpush1.msra.mxu0 0.0
    %1252 = vmatprep.subr.mxu0 0.0
    %1253 = vmatpush1.msra.mxu0 0.0
    %1254 = vmatprep.subr.mxu0 0.0
    %1255 = vmatpush1.msra.mxu0 0.0
    %1256 = vmatprep.subr.mxu0 0.0
    %1257 = vmatpush1.msra.mxu0 0.0
    %1258 = vmatprep.subr.mxu0 0.0
    %1259 = vmatpush1.msra.mxu0 0.0
    %1260 = vmatprep.subr.mxu0 0.0
    %1261 = vmatpush1.msra.mxu0 0.0
    %1262 = vmatprep.subr.mxu0 0.0
    %1263 = vmatpush1.msra.mxu0 0.0
    %1264 = vmatprep.subr.mxu0 0.0
    %1265 = vmatpush1.msra.mxu0 0.0
    %1266 = vmatprep.subr.mxu0 0.0
    %1267 = vmatpush1.msra.mxu0 0.0
    %1268 = vmatprep.subr.mxu0 0.0
    %1269 = vmatpush1.msra.mxu0 0.0
    %1270 = vmatprep.subr.mxu0 0.0
    %1271 = vmatpush1.msra.mxu0 0.0
    %1272 = vmatprep.subr.mxu0 0.0
    %1273 = vmatpush1.msra.mxu0 0.0
    %1274 = vmatprep.mubr.f32.mxu0 0.0
    %1275 = vmatmul.mubr.f32.gmra.mrb[0].mxu0 %v1208
    %v1276 = vpop.f32.mrb[0].mxu0
    %v1277 = vadd.f32 0.0, %v1276
    %v1278 = vpop.f32.mrb[0].mxu0
    %1279 = vdwg.mxu0
    %1281 = vrot.lane.b32.xlu0 %v1277, 120
    %v1282 = vpop.permute.xlu0 %1281
    %1283 = vrot.lane.b32.xlu0 %v1277, 112
    %v1284 = vpop.permute.xlu0 %1283
    %1285 = vrot.lane.b32.xlu0 %v1277, 104
    %v1286 = vpop.permute.xlu0 %1285
    %1287 = vrot.lane.b32.xlu0 %v1277, 96
    %v1288 = vpop.permute.xlu0 %1287
    %v1289 = vsel %vm231, %v1277, 0
    %v1291 = vsel %vm231, %v1288, 0
    %1293 = vmatprep.subr.mxu0 0.0
    %1294 = vmatpush1.xpose.msra.mxu0 %v1291
    %1295 = vmatprep.subr.mxu0 0.0
    %1296 = vmatpush1.xpose.msra.mxu0 0.0
    %1297 = vmatprep.subr.mxu0 0.0
    %1298 = vmatpush1.xpose.msra.mxu0 0.0
    %1299 = vmatprep.subr.mxu0 0.0
    %1300 = vmatpush1.xpose.msra.mxu0 0.0
    %1301 = vmatprep.subr.mxu0 0.0
    %1302 = vmatpush1.xpose.msra.mxu0 0.0
    %1303 = vmatprep.subr.mxu0 0.0
    %1304 = vmatpush1.xpose.msra.mxu0 0.0
    %1305 = vmatprep.subr.mxu0 0.0
    %1306 = vmatpush1.xpose.msra.mxu0 0.0
    %1307 = vmatprep.subr.mxu0 0.0
    %1308 = vmatpush1.xpose.msra.mxu0 0.0
    %1309 = vmatprep.subr.mxu0 0.0
    %1310 = vmatpush1.xpose.msra.mxu0 0.0
    %1311 = vmatprep.subr.mxu0 0.0
    %1312 = vmatpush1.xpose.msra.mxu0 0.0
    %1313 = vmatprep.subr.mxu0 0.0
    %1314 = vmatpush1.xpose.msra.mxu0 0.0
    %1315 = vmatprep.subr.mxu0 0.0
    %1316 = vmatpush1.xpose.msra.mxu0 0.0
    %1317 = vmatprep.subr.mxu0 0.0
    %1318 = vmatpush1.xpose.msra.mxu0 0.0
    %1319 = vmatprep.subr.mxu0 0.0
    %1320 = vmatpush1.xpose.msra.mxu0 0.0
    %1321 = vmatprep.subr.mxu0 0.0
    %1322 = vmatpush1.xpose.msra.mxu0 0.0
    %1323 = vmatprep.subr.mxu0 0.0
    %1324 = vmatpush1.xpose.msra.mxu0 0.0
    %1325 = vmatprep.subr.mxu0 0.0
    %1326 = vmatpush1.xpose.msra.mxu0 0.0
    %1327 = vmatprep.subr.mxu0 0.0
    %1328 = vmatpush1.xpose.msra.mxu0 0.0
    %1329 = vmatprep.subr.mxu0 0.0
    %1330 = vmatpush1.xpose.msra.mxu0 0.0
    %1331 = vmatprep.subr.mxu0 0.0
    %1332 = vmatpush1.xpose.msra.mxu0 0.0
    %1333 = vmatprep.subr.mxu0 0.0
    %1334 = vmatpush1.xpose.msra.mxu0 0.0
    %1335 = vmatprep.subr.mxu0 0.0
    %1336 = vmatpush1.xpose.msra.mxu0 0.0
    %1337 = vmatprep.subr.mxu0 0.0
    %1338 = vmatpush1.xpose.msra.mxu0 0.0
    %1339 = vmatprep.subr.mxu0 0.0
    %1340 = vmatpush1.xpose.msra.mxu0 0.0
    %1341 = vmatprep.subr.mxu0 0.0
    %1342 = vmatpush1.xpose.msra.mxu0 0.0
    %1343 = vmatprep.subr.mxu0 0.0
    %1344 = vmatpush1.xpose.msra.mxu0 0.0
    %1345 = vmatprep.subr.mxu0 0.0
    %1346 = vmatpush1.xpose.msra.mxu0 0.0
    %1347 = vmatprep.subr.mxu0 0.0
    %1348 = vmatpush1.xpose.msra.mxu0 0.0
    %1349 = vmatprep.subr.mxu0 0.0
    %1350 = vmatpush1.xpose.msra.mxu0 0.0
    %1351 = vmatprep.subr.mxu0 0.0
    %1352 = vmatpush1.xpose.msra.mxu0 0.0
    %1353 = vmatprep.subr.mxu0 0.0
    %1354 = vmatpush1.xpose.msra.mxu0 0.0
    %1355 = vmatprep.subr.mxu0 0.0
    %1356 = vmatpush1.xpose.msra.mxu0 0.0
    %1357 = vmatprep.mubr.f32.mxu0 0.0
    %1358 = vmatmul.mubr.f32.gmra.mrb[0].mxu0 %v1289
    %v1359 = vpop.f32.mrb[0].mxu0
    %v1360 = vadd.f32 0.0, %v1359
    %v1361 = vpop.f32.mrb[0].mxu0
    %1362 = vdwg.mxu0
    %1363 = vrot.lane.b32.xlu0 %v1282, 96
    %v1364 = vpop.permute.xlu0 %1363
    %v1365 = vsel %vm231, %v1282, 0
    %v1367 = vsel %vm231, %v1364, 0
    %1369 = vmatprep.subr.mxu0 0.0
    %1370 = vmatpush1.xpose.msra.mxu0 %v1367
    %1371 = vmatprep.subr.mxu0 0.0
    %1372 = vmatpush1.xpose.msra.mxu0 0.0
    %1373 = vmatprep.subr.mxu0 0.0
    %1374 = vmatpush1.xpose.msra.mxu0 0.0
    %1375 = vmatprep.subr.mxu0 0.0
    %1376 = vmatpush1.xpose.msra.mxu0 0.0
    %1377 = vmatprep.subr.mxu0 0.0
    %1378 = vmatpush1.xpose.msra.mxu0 0.0
    %1379 = vmatprep.subr.mxu0 0.0
    %1380 = vmatpush1.xpose.msra.mxu0 0.0
    %1381 = vmatprep.subr.mxu0 0.0
    %1382 = vmatpush1.xpose.msra.mxu0 0.0
    %1383 = vmatprep.subr.mxu0 0.0
    %1384 = vmatpush1.xpose.msra.mxu0 0.0
    %1385 = vmatprep.subr.mxu0 0.0
    %1386 = vmatpush1.xpose.msra.mxu0 0.0
    %1387 = vmatprep.subr.mxu0 0.0
    %1388 = vmatpush1.xpose.msra.mxu0 0.0
    %1389 = vmatprep.subr.mxu0 0.0
    %1390 = vmatpush1.xpose.msra.mxu0 0.0
    %1391 = vmatprep.subr.mxu0 0.0
    %1392 = vmatpush1.xpose.msra.mxu0 0.0
    %1393 = vmatprep.subr.mxu0 0.0
    %1394 = vmatpush1.xpose.msra.mxu0 0.0
    %1395 = vmatprep.subr.mxu0 0.0
    %1396 = vmatpush1.xpose.msra.mxu0 0.0
    %1397 = vmatprep.subr.mxu0 0.0
    %1398 = vmatpush1.xpose.msra.mxu0 0.0
    %1399 = vmatprep.subr.mxu0 0.0
    %1400 = vmatpush1.xpose.msra.mxu0 0.0
    %1401 = vmatprep.subr.mxu0 0.0
    %1402 = vmatpush1.xpose.msra.mxu0 0.0
    %1403 = vmatprep.subr.mxu0 0.0
    %1404 = vmatpush1.xpose.msra.mxu0 0.0
    %1405 = vmatprep.subr.mxu0 0.0
    %1406 = vmatpush1.xpose.msra.mxu0 0.0
    %1407 = vmatprep.subr.mxu0 0.0
    %1408 = vmatpush1.xpose.msra.mxu0 0.0
    %1409 = vmatprep.subr.mxu0 0.0
    %1410 = vmatpush1.xpose.msra.mxu0 0.0
    %1411 = vmatprep.subr.mxu0 0.0
    %1412 = vmatpush1.xpose.msra.mxu0 0.0
    %1413 = vmatprep.subr.mxu0 0.0
    %1414 = vmatpush1.xpose.msra.mxu0 0.0
    %1415 = vmatprep.subr.mxu0 0.0
    %1416 = vmatpush1.xpose.msra.mxu0 0.0
    %1417 = vmatprep.subr.mxu0 0.0
    %1418 = vmatpush1.xpose.msra.mxu0 0.0
    %1419 = vmatprep.subr.mxu0 0.0
    %1420 = vmatpush1.xpose.msra.mxu0 0.0
    %1421 = vmatprep.subr.mxu0 0.0
    %1422 = vmatpush1.xpose.msra.mxu0 0.0
    %1423 = vmatprep.subr.mxu0 0.0
    %1424 = vmatpush1.xpose.msra.mxu0 0.0
    %1425 = vmatprep.subr.mxu0 0.0
    %1426 = vmatpush1.xpose.msra.mxu0 0.0
    %1427 = vmatprep.subr.mxu0 0.0
    %1428 = vmatpush1.xpose.msra.mxu0 0.0
    %1429 = vmatprep.subr.mxu0 0.0
    %1430 = vmatpush1.xpose.msra.mxu0 0.0
    %1431 = vmatprep.subr.mxu0 0.0
    %1432 = vmatpush1.xpose.msra.mxu0 0.0
    %1433 = vmatprep.mubr.f32.mxu0 0.0
    %1434 = vmatmul.mubr.f32.gmra.mrb[0].mxu0 %v1365
    %v1435 = vpop.f32.mrb[0].mxu0
    %v1436 = vadd.f32 0.0, %v1435
    %v1437 = vpop.f32.mrb[0].mxu0
    %1438 = vdwg.mxu0
    %1439 = vrot.lane.b32.xlu0 %v1284, 96
    %v1440 = vpop.permute.xlu0 %1439
    %v1441 = vsel %vm231, %v1284, 0
    %v1443 = vsel %vm231, %v1440, 0
    %1445 = vmatprep.subr.mxu0 0.0
    %1446 = vmatpush1.xpose.msra.mxu0 %v1443
    %1447 = vmatprep.subr.mxu0 0.0
    %1448 = vmatpush1.xpose.msra.mxu0 0.0
    %1449 = vmatprep.subr.mxu0 0.0
    %1450 = vmatpush1.xpose.msra.mxu0 0.0
    %1451 = vmatprep.subr.mxu0 0.0
    %1452 = vmatpush1.xpose.msra.mxu0 0.0
    %1453 = vmatprep.subr.mxu0 0.0
    %1454 = vmatpush1.xpose.msra.mxu0 0.0
    %1455 = vmatprep.subr.mxu0 0.0
    %1456 = vmatpush1.xpose.msra.mxu0 0.0
    %1457 = vmatprep.subr.mxu0 0.0
    %1458 = vmatpush1.xpose.msra.mxu0 0.0
    %1459 = vmatprep.subr.mxu0 0.0
    %1460 = vmatpush1.xpose.msra.mxu0 0.0
    %1461 = vmatprep.subr.mxu0 0.0
    %1462 = vmatpush1.xpose.msra.mxu0 0.0
    %1463 = vmatprep.subr.mxu0 0.0
    %1464 = vmatpush1.xpose.msra.mxu0 0.0
    %1465 = vmatprep.subr.mxu0 0.0
    %1466 = vmatpush1.xpose.msra.mxu0 0.0
    %1467 = vmatprep.subr.mxu0 0.0
    %1468 = vmatpush1.xpose.msra.mxu0 0.0
    %1469 = vmatprep.subr.mxu0 0.0
    %1470 = vmatpush1.xpose.msra.mxu0 0.0
    %1471 = vmatprep.subr.mxu0 0.0
    %1472 = vmatpush1.xpose.msra.mxu0 0.0
    %1473 = vmatprep.subr.mxu0 0.0
    %1474 = vmatpush1.xpose.msra.mxu0 0.0
    %1475 = vmatprep.subr.mxu0 0.0
    %1476 = vmatpush1.xpose.msra.mxu0 0.0
    %1477 = vmatprep.subr.mxu0 0.0
    %1478 = vmatpush1.xpose.msra.mxu0 0.0
    %1479 = vmatprep.subr.mxu0 0.0
    %1480 = vmatpush1.xpose.msra.mxu0 0.0
    %1481 = vmatprep.subr.mxu0 0.0
    %1482 = vmatpush1.xpose.msra.mxu0 0.0
    %1483 = vmatprep.subr.mxu0 0.0
    %1484 = vmatpush1.xpose.msra.mxu0 0.0
    %1485 = vmatprep.subr.mxu0 0.0
    %1486 = vmatpush1.xpose.msra.mxu0 0.0
    %1487 = vmatprep.subr.mxu0 0.0
    %1488 = vmatpush1.xpose.msra.mxu0 0.0
    %1489 = vmatprep.subr.mxu0 0.0
    %1490 = vmatpush1.xpose.msra.mxu0 0.0
    %1491 = vmatprep.subr.mxu0 0.0
    %1492 = vmatpush1.xpose.msra.mxu0 0.0
    %1493 = vmatprep.subr.mxu0 0.0
    %1494 = vmatpush1.xpose.msra.mxu0 0.0
    %1495 = vmatprep.subr.mxu0 0.0
    %1496 = vmatpush1.xpose.msra.mxu0 0.0
    %1497 = vmatprep.subr.mxu0 0.0
    %1498 = vmatpush1.xpose.msra.mxu0 0.0
    %1499 = vmatprep.subr.mxu0 0.0
    %1500 = vmatpush1.xpose.msra.mxu0 0.0
    %1501 = vmatprep.subr.mxu0 0.0
    %1502 = vmatpush1.xpose.msra.mxu0 0.0
    %1503 = vmatprep.subr.mxu0 0.0
    %1504 = vmatpush1.xpose.msra.mxu0 0.0
    %1505 = vmatprep.subr.mxu0 0.0
    %1506 = vmatpush1.xpose.msra.mxu0 0.0
    %1507 = vmatprep.subr.mxu0 0.0
    %1508 = vmatpush1.xpose.msra.mxu0 0.0
    %1509 = vmatprep.mubr.f32.mxu0 0.0
    %1510 = vmatmul.mubr.f32.gmra.mrb[0].mxu0 %v1441
    %v1511 = vpop.f32.mrb[0].mxu0
    %v1512 = vadd.f32 0.0, %v1511
    %v1513 = vpop.f32.mrb[0].mxu0
    %1514 = vdwg.mxu0
    %1515 = vrot.lane.b32.xlu0 %v1286, 96
    %v1516 = vpop.permute.xlu0 %1515
    %v1517 = vsel %vm231, %v1286, 0
    %v1519 = vsel %vm231, %v1516, 0
    %1521 = vmatprep.subr.mxu0 0.0
    %1522 = vmatpush1.xpose.msra.mxu0 %v1519
    %1523 = vmatprep.subr.mxu0 0.0
    %1524 = vmatpush1.xpose.msra.mxu0 0.0
    %1525 = vmatprep.subr.mxu0 0.0
    %1526 = vmatpush1.xpose.msra.mxu0 0.0
    %1527 = vmatprep.subr.mxu0 0.0
    %1528 = vmatpush1.xpose.msra.mxu0 0.0
    %1529 = vmatprep.subr.mxu0 0.0
    %1530 = vmatpush1.xpose.msra.mxu0 0.0
    %1531 = vmatprep.subr.mxu0 0.0
    %1532 = vmatpush1.xpose.msra.mxu0 0.0
    %1533 = vmatprep.subr.mxu0 0.0
    %1534 = vmatpush1.xpose.msra.mxu0 0.0
    %1535 = vmatprep.subr.mxu0 0.0
    %1536 = vmatpush1.xpose.msra.mxu0 0.0
    %1537 = vmatprep.subr.mxu0 0.0
    %1538 = vmatpush1.xpose.msra.mxu0 0.0
    %1539 = vmatprep.subr.mxu0 0.0
    %1540 = vmatpush1.xpose.msra.mxu0 0.0
    %1541 = vmatprep.subr.mxu0 0.0
    %1542 = vmatpush1.xpose.msra.mxu0 0.0
    %1543 = vmatprep.subr.mxu0 0.0
    %1544 = vmatpush1.xpose.msra.mxu0 0.0
    %1545 = vmatprep.subr.mxu0 0.0
    %1546 = vmatpush1.xpose.msra.mxu0 0.0
    %1547 = vmatprep.subr.mxu0 0.0
    %1548 = vmatpush1.xpose.msra.mxu0 0.0
    %1549 = vmatprep.subr.mxu0 0.0
    %1550 = vmatpush1.xpose.msra.mxu0 0.0
    %1551 = vmatprep.subr.mxu0 0.0
    %1552 = vmatpush1.xpose.msra.mxu0 0.0
    %1553 = vmatprep.subr.mxu0 0.0
    %1554 = vmatpush1.xpose.msra.mxu0 0.0
    %1555 = vmatprep.subr.mxu0 0.0
    %1556 = vmatpush1.xpose.msra.mxu0 0.0
    %1557 = vmatprep.subr.mxu0 0.0
    %1558 = vmatpush1.xpose.msra.mxu0 0.0
    %1559 = vmatprep.subr.mxu0 0.0
    %1560 = vmatpush1.xpose.msra.mxu0 0.0
    %1561 = vmatprep.subr.mxu0 0.0
    %1562 = vmatpush1.xpose.msra.mxu0 0.0
    %1563 = vmatprep.subr.mxu0 0.0
    %1564 = vmatpush1.xpose.msra.mxu0 0.0
    %1565 = vmatprep.subr.mxu0 0.0
    %1566 = vmatpush1.xpose.msra.mxu0 0.0
    %1567 = vmatprep.subr.mxu0 0.0
    %1568 = vmatpush1.xpose.msra.mxu0 0.0
    %1569 = vmatprep.subr.mxu0 0.0
    %1570 = vmatpush1.xpose.msra.mxu0 0.0
    %1571 = vmatprep.subr.mxu0 0.0
    %1572 = vmatpush1.xpose.msra.mxu0 0.0
    %1573 = vmatprep.subr.mxu0 0.0
    %1574 = vmatpush1.xpose.msra.mxu0 0.0
    %1575 = vmatprep.subr.mxu0 0.0
    %1576 = vmatpush1.xpose.msra.mxu0 0.0
    %1577 = vmatprep.subr.mxu0 0.0
    %1578 = vmatpush1.xpose.msra.mxu0 0.0
    %1579 = vmatprep.subr.mxu0 0.0
    %1580 = vmatpush1.xpose.msra.mxu0 0.0
    %1581 = vmatprep.subr.mxu0 0.0
    %1582 = vmatpush1.xpose.msra.mxu0 0.0
    %1583 = vmatprep.subr.mxu0 0.0
    %1584 = vmatpush1.xpose.msra.mxu0 0.0
    %1585 = vmatprep.mubr.f32.mxu0 0.0
    %1586 = vmatmul.mubr.f32.gmra.mrb[0].mxu0 %v1517
    %v1587 = vpop.f32.mrb[0].mxu0
    %v1588 = vadd.f32 0.0, %v1587
    %v1589 = vpop.f32.mrb[0].mxu0
    %1590 = vdwg.mxu0
    %v1591 = vsel %vm231, %v1360, -inf
    %1592 = vmax.xlane.f32.xlu0 %v1591
    %v1593 = vpop.xlane.xlu0 %1592
    %v1594 = vsel %vm231, %v1436, -inf
    %1595 = vmax.xlane.f32.xlu0 %v1594
    %v1596 = vpop.xlane.xlu0 %1595
    %v1597 = vsel %vm231, %v1512, -inf
    %1598 = vmax.xlane.f32.xlu0 %v1597
    %v1599 = vpop.xlane.xlu0 %1598
    %v1600 = vsel %vm231, %v1588, -inf
    %1601 = vmax.xlane.f32.xlu0 %v1600
    %v1602 = vpop.xlane.xlu0 %1601
    %v1603 = vsub.f32 %v1360, %v1593
    %v1604 = vsub.f32 %v1436, %v1596
    %v1605 = vsub.f32 %v1512, %v1599
    %v1606 = vsub.f32 %v1588, %v1602
    %v1607 = vmul.f32 %v1603, 1.442695
    %v1608 = vpow.pop %v1607
    %v1609 = vmul.f32 %v1604, 1.442695
    %v1610 = vpow.pop %v1609
    %v1611 = vmul.f32 %v1605, 1.442695
    %v1612 = vpow.pop %v1611
    %v1613 = vmul.f32 %v1606, 1.442695
    %v1614 = vpow.pop %v1613
    %v1615 = vsel %vm231, %v1608, 0.0
    %1616 = vadd.xlane.f32.xlu0 %v1615
    %v1617 = vpop.xlane.xlu0 %1616
    %v1618 = vsel %vm231, %v1610, 0.0
    %1619 = vadd.xlane.f32.xlu0 %v1618
    %v1620 = vpop.xlane.xlu0 %1619
    %v1621 = vsel %vm231, %v1612, 0.0
    %1622 = vadd.xlane.f32.xlu0 %v1621
    %v1623 = vpop.xlane.xlu0 %1622
    %v1624 = vsel %vm231, %v1614, 0.0
    %1625 = vadd.xlane.f32.xlu0 %v1624
    %v1626 = vpop.xlane.xlu0 %1625
    %v1627 = vrcp.pop %v1617
    %v1628 = vrcp.pop %v1620
    %v1629 = vrcp.pop %v1623
    %v1630 = vrcp.pop %v1626
    %v1631 = vmul.f32 %v1608, %v1627
    %v1632 = vmul.f32 %v1610, %v1628
    %v1633 = vmul.f32 %v1612, %v1629
    %v1634 = vmul.f32 %v1614, %v1630
    %1635 = vrot.lane.b32.xlu0 %v1277, 64
    %v1636 = vpop.permute.xlu0 %1635
    %v1639 = vsel %vm231, %v1631, 0
    %1641 = vmatprep.subr.mxu0 0.0
    %1642 = vmatpush1.msra.mxu0 %v1636
    %1643 = vmatprep.subr.mxu0 0.0
    %1644 = vmatpush1.msra.mxu0 0.0
    %1645 = vmatprep.subr.mxu0 0.0
    %1646 = vmatpush1.msra.mxu0 0.0
    %1647 = vmatprep.subr.mxu0 0.0
    %1648 = vmatpush1.msra.mxu0 0.0
    %1649 = vmatprep.subr.mxu0 0.0
    %1650 = vmatpush1.msra.mxu0 0.0
    %1651 = vmatprep.subr.mxu0 0.0
    %1652 = vmatpush1.msra.mxu0 0.0
    %1653 = vmatprep.subr.mxu0 0.0
    %1654 = vmatpush1.msra.mxu0 0.0
    %1655 = vmatprep.subr.mxu0 0.0
    %1656 = vmatpush1.msra.mxu0 0.0
    %1657 = vmatprep.subr.mxu0 0.0
    %1658 = vmatpush1.msra.mxu0 0.0
    %1659 = vmatprep.subr.mxu0 0.0
    %1660 = vmatpush1.msra.mxu0 0.0
    %1661 = vmatprep.subr.mxu0 0.0
    %1662 = vmatpush1.msra.mxu0 0.0
    %1663 = vmatprep.subr.mxu0 0.0
    %1664 = vmatpush1.msra.mxu0 0.0
    %1665 = vmatprep.subr.mxu0 0.0
    %1666 = vmatpush1.msra.mxu0 0.0
    %1667 = vmatprep.subr.mxu0 0.0
    %1668 = vmatpush1.msra.mxu0 0.0
    %1669 = vmatprep.subr.mxu0 0.0
    %1670 = vmatpush1.msra.mxu0 0.0
    %1671 = vmatprep.subr.mxu0 0.0
    %1672 = vmatpush1.msra.mxu0 0.0
    %1673 = vmatprep.subr.mxu0 0.0
    %1674 = vmatpush1.msra.mxu0 0.0
    %1675 = vmatprep.subr.mxu0 0.0
    %1676 = vmatpush1.msra.mxu0 0.0
    %1677 = vmatprep.subr.mxu0 0.0
    %1678 = vmatpush1.msra.mxu0 0.0
    %1679 = vmatprep.subr.mxu0 0.0
    %1680 = vmatpush1.msra.mxu0 0.0
    %1681 = vmatprep.subr.mxu0 0.0
    %1682 = vmatpush1.msra.mxu0 0.0
    %1683 = vmatprep.subr.mxu0 0.0
    %1684 = vmatpush1.msra.mxu0 0.0
    %1685 = vmatprep.subr.mxu0 0.0
    %1686 = vmatpush1.msra.mxu0 0.0
    %1687 = vmatprep.subr.mxu0 0.0
    %1688 = vmatpush1.msra.mxu0 0.0
    %1689 = vmatprep.subr.mxu0 0.0
    %1690 = vmatpush1.msra.mxu0 0.0
    %1691 = vmatprep.subr.mxu0 0.0
    %1692 = vmatpush1.msra.mxu0 0.0
    %1693 = vmatprep.subr.mxu0 0.0
    %1694 = vmatpush1.msra.mxu0 0.0
    %1695 = vmatprep.subr.mxu0 0.0
    %1696 = vmatpush1.msra.mxu0 0.0
    %1697 = vmatprep.subr.mxu0 0.0
    %1698 = vmatpush1.msra.mxu0 0.0
    %1699 = vmatprep.subr.mxu0 0.0
    %1700 = vmatpush1.msra.mxu0 0.0
    %1701 = vmatprep.subr.mxu0 0.0
    %1702 = vmatpush1.msra.mxu0 0.0
    %1703 = vmatprep.subr.mxu0 0.0
    %1704 = vmatpush1.msra.mxu0 0.0
    %1705 = vmatprep.mubr.f32.mxu0 0.0
    %1706 = vmatmul.mubr.f32.gmra.mrb[0].mxu0 %v1639
    %v1707 = vpop.f32.mrb[0].mxu0
    %v1708 = vadd.f32 0.0, %v1707
    %v1709 = vpop.f32.mrb[0].mxu0
    %1710 = vdwg.mxu0
    %1711 = vrot.lane.b32.xlu0 %v1282, 64
    %v1712 = vpop.permute.xlu0 %1711
    %v1715 = vsel %vm231, %v1632, 0
    %1717 = vmatprep.subr.mxu0 0.0
    %1718 = vmatpush1.msra.mxu0 %v1712
    %1719 = vmatprep.subr.mxu0 0.0
    %1720 = vmatpush1.msra.mxu0 0.0
    %1721 = vmatprep.subr.mxu0 0.0
    %1722 = vmatpush1.msra.mxu0 0.0
    %1723 = vmatprep.subr.mxu0 0.0
    %1724 = vmatpush1.msra.mxu0 0.0
    %1725 = vmatprep.subr.mxu0 0.0
    %1726 = vmatpush1.msra.mxu0 0.0
    %1727 = vmatprep.subr.mxu0 0.0
    %1728 = vmatpush1.msra.mxu0 0.0
    %1729 = vmatprep.subr.mxu0 0.0
    %1730 = vmatpush1.msra.mxu0 0.0
    %1731 = vmatprep.subr.mxu0 0.0
    %1732 = vmatpush1.msra.mxu0 0.0
    %1733 = vmatprep.subr.mxu0 0.0
    %1734 = vmatpush1.msra.mxu0 0.0
    %1735 = vmatprep.subr.mxu0 0.0
    %1736 = vmatpush1.msra.mxu0 0.0
    %1737 = vmatprep.subr.mxu0 0.0
    %1738 = vmatpush1.msra.mxu0 0.0
    %1739 = vmatprep.subr.mxu0 0.0
    %1740 = vmatpush1.msra.mxu0 0.0
    %1741 = vmatprep.subr.mxu0 0.0
    %1742 = vmatpush1.msra.mxu0 0.0
    %1743 = vmatprep.subr.mxu0 0.0
    %1744 = vmatpush1.msra.mxu0 0.0
    %1745 = vmatprep.subr.mxu0 0.0
    %1746 = vmatpush1.msra.mxu0 0.0
    %1747 = vmatprep.subr.mxu0 0.0
    %1748 = vmatpush1.msra.mxu0 0.0
    %1749 = vmatprep.subr.mxu0 0.0
    %1750 = vmatpush1.msra.mxu0 0.0
    %1751 = vmatprep.subr.mxu0 0.0
    %1752 = vmatpush1.msra.mxu0 0.0
    %1753 = vmatprep.subr.mxu0 0.0
    %1754 = vmatpush1.msra.mxu0 0.0
    %1755 = vmatprep.subr.mxu0 0.0
    %1756 = vmatpush1.msra.mxu0 0.0
    %1757 = vmatprep.subr.mxu0 0.0
    %1758 = vmatpush1.msra.mxu0 0.0
    %1759 = vmatprep.subr.mxu0 0.0
    %1760 = vmatpush1.msra.mxu0 0.0
    %1761 = vmatprep.subr.mxu0 0.0
    %1762 = vmatpush1.msra.mxu0 0.0
    %1763 = vmatprep.subr.mxu0 0.0
    %1764 = vmatpush1.msra.mxu0 0.0
    %1765 = vmatprep.subr.mxu0 0.0
    %1766 = vmatpush1.msra.mxu0 0.0
    %1767 = vmatprep.subr.mxu0 0.0
    %1768 = vmatpush1.msra.mxu0 0.0
    %1769 = vmatprep.subr.mxu0 0.0
    %1770 = vmatpush1.msra.mxu0 0.0
    %1771 = vmatprep.subr.mxu0 0.0
    %1772 = vmatpush1.msra.mxu0 0.0
    %1773 = vmatprep.subr.mxu0 0.0
    %1774 = vmatpush1.msra.mxu0 0.0
    %1775 = vmatprep.subr.mxu0 0.0
    %1776 = vmatpush1.msra.mxu0 0.0
    %1777 = vmatprep.subr.mxu0 0.0
    %1778 = vmatpush1.msra.mxu0 0.0
    %1779 = vmatprep.subr.mxu0 0.0
    %1780 = vmatpush1.msra.mxu0 0.0
    %1781 = vmatprep.mubr.f32.mxu0 0.0
    %1782 = vmatmul.mubr.f32.gmra.mrb[0].mxu0 %v1715
    %v1783 = vpop.f32.mrb[0].mxu0
    %v1784 = vadd.f32 0.0, %v1783
    %v1785 = vpop.f32.mrb[0].mxu0
    %1786 = vdwg.mxu0
    %1787 = vrot.lane.b32.xlu0 %v1284, 64
    %v1788 = vpop.permute.xlu0 %1787
    %v1791 = vsel %vm231, %v1633, 0
    %1793 = vmatprep.subr.mxu0 0.0
    %1794 = vmatpush1.msra.mxu0 %v1788
    %1795 = vmatprep.subr.mxu0 0.0
    %1796 = vmatpush1.msra.mxu0 0.0
    %1797 = vmatprep.subr.mxu0 0.0
    %1798 = vmatpush1.msra.mxu0 0.0
    %1799 = vmatprep.subr.mxu0 0.0
    %1800 = vmatpush1.msra.mxu0 0.0
    %1801 = vmatprep.subr.mxu0 0.0
    %1802 = vmatpush1.msra.mxu0 0.0
    %1803 = vmatprep.subr.mxu0 0.0
    %1804 = vmatpush1.msra.mxu0 0.0
    %1805 = vmatprep.subr.mxu0 0.0
    %1806 = vmatpush1.msra.mxu0 0.0
    %1807 = vmatprep.subr.mxu0 0.0
    %1808 = vmatpush1.msra.mxu0 0.0
    %1809 = vmatprep.subr.mxu0 0.0
    %1810 = vmatpush1.msra.mxu0 0.0
    %1811 = vmatprep.subr.mxu0 0.0
    %1812 = vmatpush1.msra.mxu0 0.0
    %1813 = vmatprep.subr.mxu0 0.0
    %1814 = vmatpush1.msra.mxu0 0.0
    %1815 = vmatprep.subr.mxu0 0.0
    %1816 = vmatpush1.msra.mxu0 0.0
    %1817 = vmatprep.subr.mxu0 0.0
    %1818 = vmatpush1.msra.mxu0 0.0
    %1819 = vmatprep.subr.mxu0 0.0
    %1820 = vmatpush1.msra.mxu0 0.0
    %1821 = vmatprep.subr.mxu0 0.0
    %1822 = vmatpush1.msra.mxu0 0.0
    %1823 = vmatprep.subr.mxu0 0.0
    %1824 = vmatpush1.msra.mxu0 0.0
    %1825 = vmatprep.subr.mxu0 0.0
    %1826 = vmatpush1.msra.mxu0 0.0
    %1827 = vmatprep.subr.mxu0 0.0
    %1828 = vmatpush1.msra.mxu0 0.0
    %1829 = vmatprep.subr.mxu0 0.0
    %1830 = vmatpush1.msra.mxu0 0.0
    %1831 = vmatprep.subr.mxu0 0.0
    %1832 = vmatpush1.msra.mxu0 0.0
    %1833 = vmatprep.subr.mxu0 0.0
    %1834 = vmatpush1.msra.mxu0 0.0
    %1835 = vmatprep.subr.mxu0 0.0
    %1836 = vmatpush1.msra.mxu0 0.0
    %1837 = vmatprep.subr.mxu0 0.0
    %1838 = vmatpush1.msra.mxu0 0.0
    %1839 = vmatprep.subr.mxu0 0.0
    %1840 = vmatpush1.msra.mxu0 0.0
    %1841 = vmatprep.subr.mxu0 0.0
    %1842 = vmatpush1.msra.mxu0 0.0
    %1843 = vmatprep.subr.mxu0 0.0
    %1844 = vmatpush1.msra.mxu0 0.0
    %1845 = vmatprep.subr.mxu0 0.0
    %1846 = vmatpush1.msra.mxu0 0.0
    %1847 = vmatprep.subr.mxu0 0.0
    %1848 = vmatpush1.msra.mxu0 0.0
    %1849 = vmatprep.subr.mxu0 0.0
    %1850 = vmatpush1.msra.mxu0 0.0
    %1851 = vmatprep.subr.mxu0 0.0
    %1852 = vmatpush1.msra.mxu0 0.0
    %1853 = vmatprep.subr.mxu0 0.0
    %1854 = vmatpush1.msra.mxu0 0.0
    %1855 = vmatprep.subr.mxu0 0.0
    %1856 = vmatpush1.msra.mxu0 0.0
    %1857 = vmatprep.mubr.f32.mxu0 0.0
    %1858 = vmatmul.mubr.f32.gmra.mrb[0].mxu0 %v1791
    %v1859 = vpop.f32.mrb[0].mxu0
    %v1860 = vadd.f32 0.0, %v1859
    %v1861 = vpop.f32.mrb[0].mxu0
    %1862 = vdwg.mxu0
    %1863 = vrot.lane.b32.xlu0 %v1286, 64
    %v1864 = vpop.permute.xlu0 %1863
    %v1867 = vsel %vm231, %v1634, 0
    %1869 = vmatprep.subr.mxu0 0.0
    %1870 = vmatpush1.msra.mxu0 %v1864
    %1871 = vmatprep.subr.mxu0 0.0
    %1872 = vmatpush1.msra.mxu0 0.0
    %1873 = vmatprep.subr.mxu0 0.0
    %1874 = vmatpush1.msra.mxu0 0.0
    %1875 = vmatprep.subr.mxu0 0.0
    %1876 = vmatpush1.msra.mxu0 0.0
    %1877 = vmatprep.subr.mxu0 0.0
    %1878 = vmatpush1.msra.mxu0 0.0
    %1879 = vmatprep.subr.mxu0 0.0
    %1880 = vmatpush1.msra.mxu0 0.0
    %1881 = vmatprep.subr.mxu0 0.0
    %1882 = vmatpush1.msra.mxu0 0.0
    %1883 = vmatprep.subr.mxu0 0.0
    %1884 = vmatpush1.msra.mxu0 0.0
    %1885 = vmatprep.subr.mxu0 0.0
    %1886 = vmatpush1.msra.mxu0 0.0
    %1887 = vmatprep.subr.mxu0 0.0
    %1888 = vmatpush1.msra.mxu0 0.0
    %1889 = vmatprep.subr.mxu0 0.0
    %1890 = vmatpush1.msra.mxu0 0.0
    %1891 = vmatprep.subr.mxu0 0.0
    %1892 = vmatpush1.msra.mxu0 0.0
    %1893 = vmatprep.subr.mxu0 0.0
    %1894 = vmatpush1.msra.mxu0 0.0
    %1895 = vmatprep.subr.mxu0 0.0
    %1896 = vmatpush1.msra.mxu0 0.0
    %1897 = vmatprep.subr.mxu0 0.0
    %1898 = vmatpush1.msra.mxu0 0.0
    %1899 = vmatprep.subr.mxu0 0.0
    %1900 = vmatpush1.msra.mxu0 0.0
    %1901 = vmatprep.subr.mxu0 0.0
    %1902 = vmatpush1.msra.mxu0 0.0
    %1903 = vmatprep.subr.mxu0 0.0
    %1904 = vmatpush1.msra.mxu0 0.0
    %1905 = vmatprep.subr.mxu0 0.0
    %1906 = vmatpush1.msra.mxu0 0.0
    %1907 = vmatprep.subr.mxu0 0.0
    %1908 = vmatpush1.msra.mxu0 0.0
    %1909 = vmatprep.subr.mxu0 0.0
    %1910 = vmatpush1.msra.mxu0 0.0
    %1911 = vmatprep.subr.mxu0 0.0
    %1912 = vmatpush1.msra.mxu0 0.0
    %1913 = vmatprep.subr.mxu0 0.0
    %1914 = vmatpush1.msra.mxu0 0.0
    %1915 = vmatprep.subr.mxu0 0.0
    %1916 = vmatpush1.msra.mxu0 0.0
    %1917 = vmatprep.subr.mxu0 0.0
    %1918 = vmatpush1.msra.mxu0 0.0
    %1919 = vmatprep.subr.mxu0 0.0
    %1920 = vmatpush1.msra.mxu0 0.0
    %1921 = vmatprep.subr.mxu0 0.0
    %1922 = vmatpush1.msra.mxu0 0.0
    %1923 = vmatprep.subr.mxu0 0.0
    %1924 = vmatpush1.msra.mxu0 0.0
    %1925 = vmatprep.subr.mxu0 0.0
    %1926 = vmatpush1.msra.mxu0 0.0
    %1927 = vmatprep.subr.mxu0 0.0
    %1928 = vmatpush1.msra.mxu0 0.0
    %1929 = vmatprep.subr.mxu0 0.0
    %1930 = vmatpush1.msra.mxu0 0.0
    %1931 = vmatprep.subr.mxu0 0.0
    %1932 = vmatpush1.msra.mxu0 0.0
    %1933 = vmatprep.mubr.f32.mxu0 0.0
    %1934 = vmatmul.mubr.f32.gmra.mrb[0].mxu0 %v1867
    %v1935 = vpop.f32.mrb[0].mxu0
    %v1936 = vadd.f32 0.0, %v1935
    %v1937 = vpop.f32.mrb[0].mxu0
    %1938 = vdwg.mxu0
    %1940 = vrot.lane.b32.xlu0 %v1784, 8
    %v1941 = vpop.permute.xlu0 %1940
    %1944 = vrot.lane.b32.xlu0 %v1860, 16
    %v1945 = vpop.permute.xlu0 %1944
    %1948 = vrot.lane.b32.xlu0 %v1936, 24
    %v1949 = vpop.permute.xlu0 %1948
    %v1951 = vsel %vm231, %v1708, %v1941
    %v1952 = vsel %vm895, %v1951, %v1945
    %v1953 = vsel %vm897, %v1952, %v1949
    %s1954 = scalar_lea.vmem %s3, 32
    %v1955 = vld [vmem:[%s1954] sm:$0xff]
    %v1956 = vld [vmem:[%s1954 + $0x8] sm:$0xff]
    %v1957 = vld [vmem:[%s1954 + $0x10] sm:$0xff]
    %v1958 = vld [vmem:[%s1954 + $0x18] sm:$0xff]
    %v1959 = vlaneseq
    %v1960 = vshrl.u32 %v1959, 7
    %v1961 = vsub.s32 0, %v1960
    %v1962 = vrot.slane %v1201, %v1961
    %v1964 = vsel %vm148, %v1953, 0
    %1966 = vmatprep.subr.mxu0 0.0
    %1967 = vmatpush1.msra.mxu0 %v1955
    %1968 = vmatprep.subr.mxu0 0.0
    %1969 = vmatpush1.msra.mxu0 %v1956
    %1970 = vmatprep.subr.mxu0 0.0
    %1971 = vmatpush1.msra.mxu0 %v1957
    %1972 = vmatprep.subr.mxu0 0.0
    %1973 = vmatpush1.msra.mxu0 %v1958
    %1974 = vmatprep.subr.mxu0 0.0
    %1975 = vmatpush1.msra.mxu0 0.0
    %1976 = vmatprep.subr.mxu0 0.0
    %1977 = vmatpush1.msra.mxu0 0.0
    %1978 = vmatprep.subr.mxu0 0.0
    %1979 = vmatpush1.msra.mxu0 0.0
    %1980 = vmatprep.subr.mxu0 0.0
    %1981 = vmatpush1.msra.mxu0 0.0
    %1982 = vmatprep.subr.mxu0 0.0
    %1983 = vmatpush1.msra.mxu0 0.0
    %1984 = vmatprep.subr.mxu0 0.0
    %1985 = vmatpush1.msra.mxu0 0.0
    %1986 = vmatprep.subr.mxu0 0.0
    %1987 = vmatpush1.msra.mxu0 0.0
    %1988 = vmatprep.subr.mxu0 0.0
    %1989 = vmatpush1.msra.mxu0 0.0
    %1990 = vmatprep.subr.mxu0 0.0
    %1991 = vmatpush1.msra.mxu0 0.0
    %1992 = vmatprep.subr.mxu0 0.0
    %1993 = vmatpush1.msra.mxu0 0.0
    %1994 = vmatprep.subr.mxu0 0.0
    %1995 = vmatpush1.msra.mxu0 0.0
    %1996 = vmatprep.subr.mxu0 0.0
    %1997 = vmatpush1.msra.mxu0 0.0
    %1998 = vmatprep.subr.mxu0 0.0
    %1999 = vmatpush1.msra.mxu0 0.0
    %2000 = vmatprep.subr.mxu0 0.0
    %2001 = vmatpush1.msra.mxu0 0.0
    %2002 = vmatprep.subr.mxu0 0.0
    %2003 = vmatpush1.msra.mxu0 0.0
    %2004 = vmatprep.subr.mxu0 0.0
    %2005 = vmatpush1.msra.mxu0 0.0
    %2006 = vmatprep.subr.mxu0 0.0
    %2007 = vmatpush1.msra.mxu0 0.0
    %2008 = vmatprep.subr.mxu0 0.0
    %2009 = vmatpush1.msra.mxu0 0.0
    %2010 = vmatprep.subr.mxu0 0.0
    %2011 = vmatpush1.msra.mxu0 0.0
    %2012 = vmatprep.subr.mxu0 0.0
    %2013 = vmatpush1.msra.mxu0 0.0
    %2014 = vmatprep.subr.mxu0 0.0
    %2015 = vmatpush1.msra.mxu0 0.0
    %2016 = vmatprep.subr.mxu0 0.0
    %2017 = vmatpush1.msra.mxu0 0.0
    %2018 = vmatprep.subr.mxu0 0.0
    %2019 = vmatpush1.msra.mxu0 0.0
    %2020 = vmatprep.subr.mxu0 0.0
    %2021 = vmatpush1.msra.mxu0 0.0
    %2022 = vmatprep.subr.mxu0 0.0
    %2023 = vmatpush1.msra.mxu0 0.0
    %2024 = vmatprep.subr.mxu0 0.0
    %2025 = vmatpush1.msra.mxu0 0.0
    %2026 = vmatprep.subr.mxu0 0.0
    %2027 = vmatpush1.msra.mxu0 0.0
    %2028 = vmatprep.subr.mxu0 0.0
    %2029 = vmatpush1.msra.mxu0 0.0
    %2030 = vmatprep.mubr.f32.mxu0 0.0
    %2031 = vmatmul.mubr.f32.gmra.mrb[0].mxu0 %v1964
    %v2032 = vpop.f32.mrb[0].mxu0
    %v2033 = vadd.f32 %v1962, %v2032
    %v2034 = vpop.f32.mrb[0].mxu0
    %2035 = vdwg.mxu0
    %v2036 = vadd.f32 %v1199, %v2033
    %v2037 = vsel %vm148, %v2036, 0.0
    %2038 = vadd.xlane.f32.xlu0 %v2037
    %v2039 = vpop.xlane.xlu0 %2038
    %v2040 = vmul.f32 %v2039, %v984
    %v2041 = vsub.f32 %v2036, %v2040
    %v2042 = vmul.f32 %v2041, %v2041
    %v2043 = vsel %vm148, %v2042, 0.0
    %2044 = vadd.xlane.f32.xlu0 %v2043
    %v2045 = vpop.xlane.xlu0 %2044
    %v2046 = vmul.f32 %v2045, %v984
    %v2047 = vadd.f32 %v2046, 1e-06
    %v2048 = vrsqrt.pop %v2047
    %v2049 = vmul.f32 %v2041, %v2048
    %v2050 = vlaneseq
    %v2051 = vshrl.u32 %v2050, 7
    %v2052 = vsub.s32 1, %v2051
    %v2053 = vrot.slane %v1201, %v2052
    %v2054 = vmul.f32 %v2049, %v2053
    %v2055 = vlaneseq
    %v2056 = vshrl.u32 %v2055, 7
    %v2057 = vsub.s32 2, %v2056
    %v2058 = vrot.slane %v1201, %v2057
    %v2059 = vadd.f32 %v2054, %v2058
    %s2060 = scalar_lea.vmem %s5, 32
    %v2061 = vld [vmem:[%s2060] sm:$0xff]
    %v2062 = vld [vmem:[%s2060 + $0x8] sm:$0xff]
    %v2063 = vld [vmem:[%s2060 + $0x10] sm:$0xff]
    %v2064 = vld [vmem:[%s2060 + $0x18] sm:$0xff]
    %s2065 = scalar_lea.vmem %s6, 1
    %v2066 = vld [vmem:[%s2065] sm:$0x1]
    %v2068 = vlaneseq
    %v2069 = vshrl.u32 %v2068, 7
    %v2070 = vsub.s32 0, %v2069
    %v2071 = vrot.slane %v2066, %v2070
    %v2074 = vsel %vm148, %v2059, 0
    %2076 = vmatprep.subr.mxu0 0.0
    %2077 = vmatpush1.msra.mxu0 %v2061
    %2078 = vmatprep.subr.mxu0 0.0
    %2079 = vmatpush1.msra.mxu0 %v2062
    %2080 = vmatprep.subr.mxu0 0.0
    %2081 = vmatpush1.msra.mxu0 %v2063
    %2082 = vmatprep.subr.mxu0 0.0
    %2083 = vmatpush1.msra.mxu0 %v2064
    %2084 = vmatprep.subr.mxu0 0.0
    %2085 = vmatpush1.msra.mxu0 0.0
    %2086 = vmatprep.subr.mxu0 0.0
    %2087 = vmatpush1.msra.mxu0 0.0
    %2088 = vmatprep.subr.mxu0 0.0
    %2089 = vmatpush1.msra.mxu0 0.0
    %2090 = vmatprep.subr.mxu0 0.0
    %2091 = vmatpush1.msra.mxu0 0.0
    %2092 = vmatprep.subr.mxu0 0.0
    %2093 = vmatpush1.msra.mxu0 0.0
    %2094 = vmatprep.subr.mxu0 0.0
    %2095 = vmatpush1.msra.mxu0 0.0
    %2096 = vmatprep.subr.mxu0 0.0
    %2097 = vmatpush1.msra.mxu0 0.0
    %2098 = vmatprep.subr.mxu0 0.0
    %2099 = vmatpush1.msra.mxu0 0.0
    %2100 = vmatprep.subr.mxu0 0.0
    %2101 = vmatpush1.msra.mxu0 0.0
    %2102 = vmatprep.subr.mxu0 0.0
    %2103 = vmatpush1.msra.mxu0 0.0
    %2104 = vmatprep.subr.mxu0 0.0
    %2105 = vmatpush1.msra.mxu0 0.0
    %2106 = vmatprep.subr.mxu0 0.0
    %2107 = vmatpush1.msra.mxu0 0.0
    %2108 = vmatprep.subr.mxu0 0.0
    %2109 = vmatpush1.msra.mxu0 0.0
    %2110 = vmatprep.subr.mxu0 0.0
    %2111 = vmatpush1.msra.mxu0 0.0
    %2112 = vmatprep.subr.mxu0 0.0
    %2113 = vmatpush1.msra.mxu0 0.0
    %2114 = vmatprep.subr.mxu0 0.0
    %2115 = vmatpush1.msra.mxu0 0.0
    %2116 = vmatprep.subr.mxu0 0.0
    %2117 = vmatpush1.msra.mxu0 0.0
    %2118 = vmatprep.subr.mxu0 0.0
    %2119 = vmatpush1.msra.mxu0 0.0
    %2120 = vmatprep.subr.mxu0 0.0
    %2121 = vmatpush1.msra.mxu0 0.0
    %2122 = vmatprep.subr.mxu0 0.0
    %2123 = vmatpush1.msra.mxu0 0.0
    %2124 = vmatprep.subr.mxu0 0.0
    %2125 = vmatpush1.msra.mxu0 0.0
    %2126 = vmatprep.subr.mxu0 0.0
    %2127 = vmatpush1.msra.mxu0 0.0
    %2128 = vmatprep.subr.mxu0 0.0
    %2129 = vmatpush1.msra.mxu0 0.0
    %2130 = vmatprep.subr.mxu0 0.0
    %2131 = vmatpush1.msra.mxu0 0.0
    %2132 = vmatprep.subr.mxu0 0.0
    %2133 = vmatpush1.msra.mxu0 0.0
    %2134 = vmatprep.subr.mxu0 0.0
    %2135 = vmatpush1.msra.mxu0 0.0
    %2136 = vmatprep.subr.mxu0 0.0
    %2137 = vmatpush1.msra.mxu0 0.0
    %2138 = vmatprep.subr.mxu0 0.0
    %2139 = vmatpush1.msra.mxu0 0.0
    %2140 = vmatprep.mubr.f32.mxu0 0.0
    %2141 = vmatmul.mubr.f32.gmra.mrb[0].mxu0 %v2074
    %v2142 = vpop.f32.mrb[0].mxu0
    %v2143 = vadd.f32 %v2071, %v2142
    %v2144 = vpop.f32.mrb[0].mxu0
    %2145 = vdwg.mxu0
    %v2146 = vmax.f32 %v2143, 0.0
    %s2147 = scalar_lea.vmem %s7, 64
    %v2148 = vld [vmem:[%s2147] sm:$0xff]
    %v2149 = vld [vmem:[%s2147 + $0x8] sm:$0xff]
    %v2150 = vld [vmem:[%s2147 + $0x10] sm:$0xff]
    %v2151 = vld [vmem:[%s2147 + $0x18] sm:$0xff]
    %v2152 = vld [vmem:[%s2147 + $0x20] sm:$0xff]
    %v2153 = vld [vmem:[%s2147 + $0x28] sm:$0xff]
    %v2154 = vld [vmem:[%s2147 + $0x30] sm:$0xff]
    %v2155 = vld [vmem:[%s2147 + $0x38] sm:$0xff]
    %v2156 = vlaneseq
    %v2157 = vshrl.u32 %v2156, 7
    %v2158 = vsub.s32 3, %v2157
    %v2159 = vrot.slane %v1201, %v2158
    %v2161 = vsel %vm1102, %v2146, 0
    %2163 = vmatprep.subr.mxu0 0.0
    %2164 = vmatpush1.msra.mxu0 %v2148
    %2165 = vmatprep.subr.mxu0 0.0
    %2166 = vmatpush1.msra.mxu0 %v2149
    %2167 = vmatprep.subr.mxu0 0.0
    %2168 = vmatpush1.msra.mxu0 %v2150
    %2169 = vmatprep.subr.mxu0 0.0
    %2170 = vmatpush1.msra.mxu0 %v2151
    %2171 = vmatprep.subr.mxu0 0.0
    %2172 = vmatpush1.msra.mxu0 %v2152
    %2173 = vmatprep.subr.mxu0 0.0
    %2174 = vmatpush1.msra.mxu0 %v2153
    %2175 = vmatprep.subr.mxu0 0.0
    %2176 = vmatpush1.msra.mxu0 %v2154
    %2177 = vmatprep.subr.mxu0 0.0
    %2178 = vmatpush1.msra.mxu0 %v2155
    %2179 = vmatprep.subr.mxu0 0.0
    %2180 = vmatpush1.msra.mxu0 0.0
    %2181 = vmatprep.subr.mxu0 0.0
    %2182 = vmatpush1.msra.mxu0 0.0
    %2183 = vmatprep.subr.mxu0 0.0
    %2184 = vmatpush1.msra.mxu0 0.0
    %2185 = vmatprep.subr.mxu0 0.0
    %2186 = vmatpush1.msra.mxu0 0.0
    %2187 = vmatprep.subr.mxu0 0.0
    %2188 = vmatpush1.msra.mxu0 0.0
    %2189 = vmatprep.subr.mxu0 0.0
    %2190 = vmatpush1.msra.mxu0 0.0
    %2191 = vmatprep.subr.mxu0 0.0
    %2192 = vmatpush1.msra.mxu0 0.0
    %2193 = vmatprep.subr.mxu0 0.0
    %2194 = vmatpush1.msra.mxu0 0.0
    %2195 = vmatprep.subr.mxu0 0.0
    %2196 = vmatpush1.msra.mxu0 0.0
    %2197 = vmatprep.subr.mxu0 0.0
    %2198 = vmatpush1.msra.mxu0 0.0
    %2199 = vmatprep.subr.mxu0 0.0
    %2200 = vmatpush1.msra.mxu0 0.0
    %2201 = vmatprep.subr.mxu0 0.0
    %2202 = vmatpush1.msra.mxu0 0.0
    %2203 = vmatprep.subr.mxu0 0.0
    %2204 = vmatpush1.msra.mxu0 0.0
    %2205 = vmatprep.subr.mxu0 0.0
    %2206 = vmatpush1.msra.mxu0 0.0
    %2207 = vmatprep.subr.mxu0 0.0
    %2208 = vmatpush1.msra.mxu0 0.0
    %2209 = vmatprep.subr.mxu0 0.0
    %2210 = vmatpush1.msra.mxu0 0.0
    %2211 = vmatprep.subr.mxu0 0.0
    %2212 = vmatpush1.msra.mxu0 0.0
    %2213 = vmatprep.subr.mxu0 0.0
    %2214 = vmatpush1.msra.mxu0 0.0
    %2215 = vmatprep.subr.mxu0 0.0
    %2216 = vmatpush1.msra.mxu0 0.0
    %2217 = vmatprep.subr.mxu0 0.0
    %2218 = vmatpush1.msra.mxu0 0.0
    %2219 = vmatprep.subr.mxu0 0.0
    %2220 = vmatpush1.msra.mxu0 0.0
    %2221 = vmatprep.subr.mxu0 0.0
    %2222 = vmatpush1.msra.mxu0 0.0
    %2223 = vmatprep.subr.mxu0 0.0
    %2224 = vmatpush1.msra.mxu0 0.0
    %2225 = vmatprep.subr.mxu0 0.0
    %2226 = vmatpush1.msra.mxu0 0.0
    %2227 = vmatprep.mubr.f32.mxu0 0.0
    %2228 = vmatmul.mubr.f32.gmra.mrb[0].mxu0 %v2161
    %v2229 = vpop.f32.mrb[0].mxu0
    %v2230 = vadd.f32 %v2159, %v2229
    %v2231 = vpop.f32.mrb[0].mxu0
    %2232 = vdwg.mxu0
    %v2233 = vadd.f32 %v2059, %v2230
    %v2234 = vsel %vm148, %v2233, 0.0
    %2235 = vadd.xlane.f32.xlu0 %v2234
    %v2236 = vpop.xlane.xlu0 %2235
    %v2237 = vmul.f32 %v2236, %v984
    %v2238 = vsub.f32 %v2233, %v2237
    %v2239 = vmul.f32 %v2238, %v2238
    %v2240 = vsel %vm148, %v2239, 0.0
    %2241 = vadd.xlane.f32.xlu0 %v2240
    %v2242 = vpop.xlane.xlu0 %2241
    %v2243 = vmul.f32 %v2242, %v984
    %v2244 = vadd.f32 %v2243, 1e-06
    %v2245 = vrsqrt.pop %v2244
    %v2246 = vmul.f32 %v2238, %v2245
    %v2247 = vlaneseq
    %v2248 = vshrl.u32 %v2247, 7
    %v2249 = vsub.s32 4, %v2248
    %v2250 = vrot.slane %v1201, %v2249
    %v2251 = vmul.f32 %v2246, %v2250
    %v2252 = vlaneseq
    %v2253 = vshrl.u32 %v2252, 7
    %v2254 = vsub.s32 5, %v2253
    %v2255 = vrot.slane %v1201, %v2254
    %v2256 = vadd.f32 %v2251, %v2255
    %v2257 = vld [vmem:[%s8] sm:$0xff]
    %v2258 = vld [vmem:[%s8 + $0x8] sm:$0xff]
    %v2259 = vld [vmem:[%s8 + $0x10] sm:$0xff]
    %v2260 = vld [vmem:[%s8 + $0x18] sm:$0xff]
    %v2262 = vsel %vm148, %v2256, 0
    %2264 = vmatprep.subr.mxu0 0.0
    %2265 = vmatpush1.msra.mxu0 %v2257
    %2266 = vmatprep.subr.mxu0 0.0
    %2267 = vmatpush1.msra.mxu0 %v2258
    %2268 = vmatprep.subr.mxu0 0.0
    %2269 = vmatpush1.msra.mxu0 %v2259
    %2270 = vmatprep.subr.mxu0 0.0
    %2271 = vmatpush1.msra.mxu0 %v2260
    %2272 = vmatprep.subr.mxu0 0.0
    %2273 = vmatpush1.msra.mxu0 0.0
    %2274 = vmatprep.subr.mxu0 0.0
    %2275 = vmatpush1.msra.mxu0 0.0
    %2276 = vmatprep.subr.mxu0 0.0
    %2277 = vmatpush1.msra.mxu0 0.0
    %2278 = vmatprep.subr.mxu0 0.0
    %2279 = vmatpush1.msra.mxu0 0.0
    %2280 = vmatprep.subr.mxu0 0.0
    %2281 = vmatpush1.msra.mxu0 0.0
    %2282 = vmatprep.subr.mxu0 0.0
    %2283 = vmatpush1.msra.mxu0 0.0
    %2284 = vmatprep.subr.mxu0 0.0
    %2285 = vmatpush1.msra.mxu0 0.0
    %2286 = vmatprep.subr.mxu0 0.0
    %2287 = vmatpush1.msra.mxu0 0.0
    %2288 = vmatprep.subr.mxu0 0.0
    %2289 = vmatpush1.msra.mxu0 0.0
    %2290 = vmatprep.subr.mxu0 0.0
    %2291 = vmatpush1.msra.mxu0 0.0
    %2292 = vmatprep.subr.mxu0 0.0
    %2293 = vmatpush1.msra.mxu0 0.0
    %2294 = vmatprep.subr.mxu0 0.0
    %2295 = vmatpush1.msra.mxu0 0.0
    %2296 = vmatprep.subr.mxu0 0.0
    %2297 = vmatpush1.msra.mxu0 0.0
    %2298 = vmatprep.subr.mxu0 0.0
    %2299 = vmatpush1.msra.mxu0 0.0
    %2300 = vmatprep.subr.mxu0 0.0
    %2301 = vmatpush1.msra.mxu0 0.0
    %2302 = vmatprep.subr.mxu0 0.0
    %2303 = vmatpush1.msra.mxu0 0.0
    %2304 = vmatprep.subr.mxu0 0.0
    %2305 = vmatpush1.msra.mxu0 0.0
    %2306 = vmatprep.subr.mxu0 0.0
    %2307 = vmatpush1.msra.mxu0 0.0
    %2308 = vmatprep.subr.mxu0 0.0
    %2309 = vmatpush1.msra.mxu0 0.0
    %2310 = vmatprep.subr.mxu0 0.0
    %2311 = vmatpush1.msra.mxu0 0.0
    %2312 = vmatprep.subr.mxu0 0.0
    %2313 = vmatpush1.msra.mxu0 0.0
    %2314 = vmatprep.subr.mxu0 0.0
    %2315 = vmatpush1.msra.mxu0 0.0
    %2316 = vmatprep.subr.mxu0 0.0
    %2317 = vmatpush1.msra.mxu0 0.0
    %2318 = vmatprep.subr.mxu0 0.0
    %2319 = vmatpush1.msra.mxu0 0.0
    %2320 = vmatprep.subr.mxu0 0.0
    %2321 = vmatpush1.msra.mxu0 0.0
    %2322 = vmatprep.subr.mxu0 0.0
    %2323 = vmatpush1.msra.mxu0 0.0
    %2324 = vmatprep.subr.mxu0 0.0
    %2325 = vmatpush1.msra.mxu0 0.0
    %2326 = vmatprep.subr.mxu0 0.0
    %2327 = vmatpush1.msra.mxu0 0.0
    %2328 = vmatprep.mubr.f32.mxu0 0.0
    %2329 = vmatmul.mubr.f32.gmra.mrb[0].mxu0 %v2262
    %v2330 = vpop.f32.mrb[0].mxu0
    %v2331 = vadd.f32 0.0, %v2330
    %v2332 = vpop.f32.mrb[0].mxu0
    %2333 = vdwg.mxu0
    %v2334 = vrot.slane %v2331, 4
    %v2335 = vadd.f32 %v2331, %v2334
    %v2336 = vrot.slane %v2335, 2
    %v2337 = vadd.f32 %v2335, %v2336
    %v2338 = vrot.slane %v2337, 1
    %v2339 = vadd.f32 %v2337, %v2338
    %v2340 = vrcp.pop 8.0
    %v2341 = vmul.f32 %v2339, %v2340
    %v2342 = vsub.f32 %v2331, %v2341
    %v2343 = vmul.f32 %v2342, %v2342
    %v2344 = vrot.slane %v2343, 4
    %v2345 = vadd.f32 %v2343, %v2344
    %v2346 = vrot.slane %v2345, 2
    %v2347 = vadd.f32 %v2345, %v2346
    %v2348 = vrot.slane %v2347, 1
    %v2349 = vadd.f32 %v2347, %v2348
    %v2350 = vmul.f32 %v2349, %v2340
    %v2351 = vld [vmem:[%s9] sm:$0x1]
    %v2352 = vld [vmem:[%s9 + $0x1] sm:$0x1]
    %v2353 = vadd.f32 %v2350, 1e-05
    %v2354 = vrsqrt.pop %v2353
    %v2355 = vmul.f32 %v2342, %v2354
    %v2356 = vlaneseq
    %v2357 = vshrl.u32 %v2356, 7
    %v2358 = vsub.s32 0, %v2357
    %v2359 = vrot.slane %v2351, %v2358
    %v2360 = vmul.f32 %v2355, %v2359
    %v2361 = vlaneseq
    %v2362 = vshrl.u32 %v2361, 7
    %v2363 = vsub.s32 0, %v2362
    %v2364 = vrot.slane %v2352, %v2363
    %v2365 = vadd.f32 %v2360, %v2364
    %v2366 = vmax.f32 %v2365, 0.0
    %2367 = vst [vmem:[#allocation7] sm:$0xff] %v2366
    // Predicated region
    $region50: #{tpu_custom_call.1} parent=1 // pred_check
      _
    $region51: #{tpu_custom_call.1} parent=1 // pred_check_branch
      %2369 = sbr.rel (0) target = $region53
    $region52: #{tpu_custom_call.1} parent=1 // pred_region
      %s2371 = ssub.s32 128, 128
      %2372 = vsyncadd [#allocation4], %s2371
      %s2374 = sshll.u32 [#allocation7], 4
      %s2375 = int_to_ptr.vmem [resolvable:$true] %s2374
      %2377 = dma.vmem_to_hbm [thread:$0]  %s2375, 128, %s10, [#allocation4]
    $region53: #{tpu_custom_call.1} parent=1 // pred_fallthru
      _
    // Predicated region
    $region54: #{tpu_custom_call.1} parent=1 // pred_check
      _
    $region55: #{tpu_custom_call.1} parent=1 // pred_check_branch
      %2379 = sbr.rel (0) target = $region57
    $region56: #{tpu_custom_call.1} parent=1 // pred_region
      %2380 = dma.done [#allocation4], 128
    $region57: #{tpu_custom_call.1} parent=1 // pred_fallthru
      _
    %2381 = vsyncpa [#allocation3], 1
    %2382 = vsyncpa [#allocation6], 1
    %2383 = vsyncpa [#allocation4], 1

</llo_original>
